<compile_context>
chip_gen: v6e
topology: v6e:2x2x1
jax: 0.10.0
libtpu: 0.0.40
codegen_flags: <defaults>
</compile_context>

<pallas_src>
import functools

import jax
import jax.numpy as jnp
from jax.experimental import pallas as pl
from jax.experimental.pallas import tpu as pltpu

LN_EPS = 1e-5  # nn.LayerNorm default
_DEFAULT_VMEM_CAP = 64 * 1024 * 1024  # conservative fallback (v7x per-TC VMEM)


def _round_up(x, m):
    return ((x + m - 1) // m) * m


def _cdiv(a, b):
    return (a + b - 1) // b


def _vmem_capacity_bytes():
    try:
        return int(pltpu.get_tpu_info().vmem_capacity_bytes)
    except Exception:  # not on TPU / API shape differs -> be conservative
        return _DEFAULT_VMEM_CAP


def _plan(N, D, H, tm_req, th_req, vmem_limit_req, mxu_itemsize):
    """Pick (tm, th, weight_buffer_count, vmem_limit_bytes) from static shapes."""
    cap = _vmem_capacity_bytes()
    # Never request the whole physical VMEM (leave room for compiler scratch).
    vmem_limit = int(vmem_limit_req) if vmem_limit_req is not None else (cap * 3) // 4
    vmem_limit = min(vmem_limit, (cap * 3) // 4)
    budget = (vmem_limit * 9) // 10  # planning headroom

    h_full = _round_up(H, 128)
    n8 = _round_up(max(N, 1), 8)

    def bytes_needed(tm, th, wbuf):
        return (
            2 * tm * D * 4                                   # x tile (double-buffered f32)
            + 2 * tm * D * 4                                 # out tile (double-buffered f32)
            + tm * D * 4                                     # f32 layer2 accumulator
            + tm * D * mxu_itemsize                          # casted-x scratch
            + wbuf * th * (2 * D * mxu_itemsize + 4)         # w1 + w2 blocks + b1 chunk
            + 2 * 3 * D * 4                                  # b2 / gamma / beta
        )

    # Row-tile candidates (largest first).  Cap so there are >= 2 row tiles
    # whenever possible: the "parallel" row axis is what spans v7x's 2 TCs.
    tm_cap = n8 if N <= 8 else min(n8, _round_up(_cdiv(N, 2), 8))
    if tm_req is not None:
        tm_cands = [max(8, min(_round_up(tm_req, 8), tm_cap))]
    else:
        tm_cands = sorted(
            {max(8, min(t, tm_cap)) for t in (1024, 512, 256, 128, 64, 32, 16, 8)},
            reverse=True)

    # 1) Full weight residency: single k step, weights DMA'd once total.
    if th_req is None or _round_up(th_req, 128) >= h_full:
        for tm in tm_cands:
            if tm < 64 and tm_req is None:
                break  # residency at tiny row tiles isn't worth it; stream instead
            if bytes_needed(tm, h_full, 2) <= budget:
                return tm, h_full, 2, vmem_limit

    # 2) Stream the hidden dim; prefer larger tm (raises flops/byte of the
    #    weight stream), then larger th, then deeper weight buffering.
    if th_req is not None:
        th_cands = [max(128, min(_round_up(th_req, 128), h_full))]
    else:
        th_cands = sorted({max(128, min(t, h_full)) for t in (512, 256, 128)},
                          reverse=True)

    for tm in tm_cands:
        for th in th_cands:
            if bytes_needed(tm, th, 2) <= budget:
                wbuf = 3 if bytes_needed(tm, th, 3) <= budget else 2
                return tm, th, wbuf, vmem_limit

    # Last resort (tiny VMEM budget).
    return 8, 128, 2, vmem_limit


def _ffn_kernel(x_ref, w1_ref, b1_ref, w2_ref, b2_ref, g_ref, beta_ref,
                o_ref, acc_ref, xcast_ref):
    k = pl.program_id(1)

    @pl.when(k == 0)
    def _():
        acc_ref[...] = jnp.zeros_like(acc_ref)
        # Cast the row tile for the MXU once per row tile (not once per k step).
        xcast_ref[...] = x_ref[...].astype(xcast_ref.dtype)

    # --- layer1 chunk + bias + ReLU (f32 accumulate) -----------------------
    h = jnp.dot(xcast_ref[...], w1_ref[...],                 # (tm, th) f32
                preferred_element_type=jnp.float32)
    h = jnp.maximum(h + b1_ref[...], 0.0)

    # --- partial layer2: accumulate this hidden chunk's contribution -------
    acc_ref[...] += jnp.dot(h.astype(w2_ref.dtype), w2_ref[...],
                            preferred_element_type=jnp.float32)  # (tm, D)

    # --- finalize: bias, residual add, fused LayerNorm ----------------------
    @pl.when(k == pl.num_programs(1) - 1)
    def _():
        y = x_ref[...].astype(jnp.float32) + acc_ref[...] + b2_ref[...]   # (tm, D)
        inv_d = 1.0 / y.shape[-1]
        s1 = jnp.sum(y, axis=-1, keepdims=True)
        s2 = jnp.sum(y * y, axis=-1, keepdims=True)
        mean = s1 * inv_d
        var = jnp.maximum(s2 * inv_d - mean * mean, 0.0)
        inv = jax.lax.rsqrt(var + LN_EPS)
        o_ref[...] = ((y - mean) * inv * g_ref[...] + beta_ref[...]).astype(o_ref.dtype)


@functools.partial(jax.jit,
                   static_argnames=("tm", "th", "n_wbuf", "vmem_limit_bytes",
                                    "mxu_dtype"))
def _ffn_pallas(x, w1, b1, w2, b2, gamma, beta, *, tm, th, n_wbuf,
                vmem_limit_bytes, mxu_dtype):
    N, D = x.shape
    H = w1.shape[1]

    n_pad = _round_up(N, tm)
    h_pad = _round_up(H, th)

    x_in = jnp.pad(x, ((0, n_pad - N), (0, 0))) if n_pad != N else x

    # Weights in the MXU operand dtype; pad H (zero columns of w1 / rows of w2
    # / entries of b1 are inert: relu(0) * 0 = 0).
    w1c = w1.astype(mxu_dtype)
    w2c = w2.astype(mxu_dtype)
    b1f = b1.astype(jnp.float32)
    if h_pad != H:
        w1c = jnp.pad(w1c, ((0, 0), (0, h_pad - H)))
        w2c = jnp.pad(w2c, ((0, h_pad - H), (0, 0)))
        b1f = jnp.pad(b1f, ((0, h_pad - H),))

    b1_2d = b1f.reshape(1, h_pad)
    b2_2d = b2.astype(jnp.float32).reshape(1, D)
    g_2d = gamma.astype(jnp.float32).reshape(1, D)
    beta_2d = beta.astype(jnp.float32).reshape(1, D)

    grid = (n_pad // tm, h_pad // th)

    # Streamed-weight specs get deeper pipelining only when actually streaming
    # and the planner found VMEM headroom for it.
    if grid[1] > 1 and n_wbuf > 2:
        w1_spec = pl.BlockSpec((D, th), lambda i, k: (0, k),
                               pipeline_mode=pl.Buffered(n_wbuf))
        w2_spec = pl.BlockSpec((th, D), lambda i, k: (k, 0),
                               pipeline_mode=pl.Buffered(n_wbuf))
    else:
        w1_spec = pl.BlockSpec((D, th), lambda i, k: (0, k))
        w2_spec = pl.BlockSpec((th, D), lambda i, k: (k, 0))

    itemsize = jnp.dtype(mxu_dtype).itemsize
    weight_bytes = 2 * D * h_pad * itemsize
    weight_passes = 1 if grid[1] == 1 else grid[0]
    cost = pl.CostEstimate(
        flops=4 * n_pad * D * h_pad + 10 * n_pad * D,
        transcendentals=n_pad,
        bytes_accessed=(2 * n_pad * D * 4
                        + weight_bytes * weight_passes
                        + (h_pad + 3 * D) * 4),
    )

    out = pl.pallas_call(
        _ffn_kernel,
        out_shape=jax.ShapeDtypeStruct((n_pad, D), x.dtype),
        grid_spec=pltpu.PrefetchScalarGridSpec(
            num_scalar_prefetch=0,
            grid=grid,
            in_specs=[
                pl.BlockSpec((tm, D), lambda i, k: (i, 0)),   # x row tile (resident over k)
                w1_spec,                                      # w1 column chunk
                pl.BlockSpec((1, th), lambda i, k: (0, k)),   # b1 chunk
                w2_spec,                                      # w2 row chunk
                pl.BlockSpec((1, D), lambda i, k: (0, 0)),    # b2
                pl.BlockSpec((1, D), lambda i, k: (0, 0)),    # gamma
                pl.BlockSpec((1, D), lambda i, k: (0, 0)),    # beta
            ],
            out_specs=pl.BlockSpec((tm, D), lambda i, k: (i, 0)),
            scratch_shapes=[
                pltpu.VMEM((tm, D), jnp.float32),  # layer2 f32 accumulator
                pltpu.VMEM((tm, D), mxu_dtype),    # casted x (filled once per row tile)
            ],
        ),
        compiler_params=pltpu.CompilerParams(
            dimension_semantics=("parallel", "arbitrary"),
            vmem_limit_bytes=vmem_limit_bytes),
        cost_estimate=cost,
    )(x_in, w1c, b1_2d, w2c, b2_2d, g_2d, beta_2d)

    return out[:N] if n_pad != N else out


def position_wise_ffn(x, w1, b1, w2, b2, gamma, beta, *, tm=None, th=None,
                      vmem_limit_bytes=None, mxu_dtype=jnp.bfloat16):
    """x: [..., D]; w1: [D, H]; b1: [H]; w2: [H, D]; b2/gamma/beta: [D].

    mxu_dtype=jnp.bfloat16 (fast) or jnp.float32 (closer to the f32 torch path).
    """
    orig_shape = x.shape
    D = orig_shape[-1]
    H = w1.shape[1]
    x2 = x.reshape(-1, D)
    N = x2.shape[0]

    itemsize = jnp.dtype(mxu_dtype).itemsize
    tm_p, th_p, n_wbuf, vmem_limit = _plan(N, D, H, tm, th, vmem_limit_bytes,
                                           itemsize)
    out = _ffn_pallas(x2, w1, b1, w2, b2, gamma, beta,
                      tm=tm_p, th=th_p, n_wbuf=n_wbuf,
                      vmem_limit_bytes=vmem_limit, mxu_dtype=mxu_dtype)
    return out.reshape(orig_shape)


def ffn_reference(x, w1, b1, w2, b2, gamma, beta, mxu_dtype=jnp.bfloat16):
    """Matched-precision reference (mxu_dtype matmul operands, f32 accumulate)."""
    h = jnp.dot(x.astype(mxu_dtype), w1.astype(mxu_dtype),
                preferred_element_type=jnp.float32) + b1
    h = jnp.maximum(h, 0.0)
    r = jnp.dot(h.astype(mxu_dtype), w2.astype(mxu_dtype),
                preferred_element_type=jnp.float32) + b2
    y = x.astype(jnp.float32) + r
    mean = jnp.mean(y, axis=-1, keepdims=True)
    var = jnp.mean((y - mean) ** 2, axis=-1, keepdims=True)
    out = (y - mean) * jax.lax.rsqrt(var + LN_EPS) * gamma + beta
    return out.astype(x.dtype)


if __name__ == "__main__":
    # Small, lane-dense demo dims (features are 128-multiples so stores are
    # unmasked); N = 256 rows -> >= 2 row tiles for the parallel axis.
    B, S = 2, 128
    D_IN = 128            # input == output features (required by the residual add)
    D_HID = 512           # hidden features

    key = jax.random.PRNGKey(0)
    kx, k1, k2, k3, k4 = jax.random.split(key, 5)

    x = jax.random.normal(kx, (B, S, D_IN), dtype=jnp.float32)

    # torch-Linear-like init bounds, weights stored as [in, out] (torch weight.T)
    bound1 = 1.0 / (D_IN ** 0.5)
    w1 = jax.random.uniform(k1, (D_IN, D_HID), minval=-bound1, maxval=bound1,
                            dtype=jnp.float32)
    b1 = jax.random.uniform(k2, (D_HID,), minval=-bound1, maxval=bound1,
                            dtype=jnp.float32)
    bound2 = 1.0 / (D_HID ** 0.5)
    w2 = jax.random.uniform(k3, (D_HID, D_IN), minval=-bound2, maxval=bound2,
                            dtype=jnp.float32)
    b2 = jax.random.uniform(k4, (D_IN,), minval=-bound2, maxval=bound2,
                            dtype=jnp.float32)
    gamma = jnp.ones((D_IN,), dtype=jnp.float32)
    beta = jnp.zeros((D_IN,), dtype=jnp.float32)

    # Default fast path: bf16 MXU operands, f32 accumulation / LayerNorm.
    out = position_wise_ffn(x, w1, b1, w2, b2, gamma, beta)
    out = jax.block_until_ready(out)
    ref = ffn_reference(x, w1, b1, w2, b2, gamma, beta, mxu_dtype=jnp.bfloat16)
    assert out.shape == (B, S, D_IN)
    assert jnp.allclose(out, ref, atol=2e-2, rtol=2e-2), "bf16-path mismatch"

    # f32-operand path (closer to the pure-f32 PyTorch forward).
    out32 = position_wise_ffn(x, w1, b1, w2, b2, gamma, beta,
                              mxu_dtype=jnp.float32)
    out32 = jax.block_until_ready(out32)
    ref32 = ffn_reference(x, w1, b1, w2, b2, gamma, beta, mxu_dtype=jnp.float32)
    assert jnp.allclose(out32, ref32, atol=2e-2, rtol=2e-2), "f32-path mismatch"

    print("KERNEL_OK")
</pallas_src>

<mosaic_0001>
module attributes {stable_mosaic.version = 11 : i64} {
  func.func @_ffn_kernel(%arg0: i32, %arg1: i32, %arg2: memref<128x128xf32, #tpu.memory_space<vmem>>, %arg3: memref<128x512xbf16, #tpu.memory_space<vmem>>, %arg4: memref<1x512xf32, #tpu.memory_space<vmem>>, %arg5: memref<512x128xbf16, #tpu.memory_space<vmem>>, %arg6: memref<1x128xf32, #tpu.memory_space<vmem>>, %arg7: memref<1x128xf32, #tpu.memory_space<vmem>>, %arg8: memref<1x128xf32, #tpu.memory_space<vmem>>, %arg9: memref<128x128xf32, #tpu.memory_space<vmem>>, %arg10: memref<128x128xf32, #tpu.memory_space<vmem>>, %arg11: memref<128x128xbf16, #tpu.memory_space<vmem>>) attributes {dimension_semantics = [#tpu.dimension_semantics<parallel>, #tpu.dimension_semantics<arbitrary>], iteration_bounds = array<i64: 2, 1>, scalar_prefetch = 0 : i64, scratch_operands = 2 : i64, tpu.core_type = #tpu.core_type<tc>, window_params = [{transform_indices = @transform_0, window_bounds = array<i64: 128, 128>}, {transform_indices = @transform_1, window_bounds = array<i64: 128, 512>}, {transform_indices = @transform_2, window_bounds = array<i64: 1, 512>}, {transform_indices = @transform_3, window_bounds = array<i64: 512, 128>}, {pipeline_mode = #tpu.pipeline_mode<synchronous>, transform_indices = @transform_4, window_bounds = array<i64: 1, 128>}, {pipeline_mode = #tpu.pipeline_mode<synchronous>, transform_indices = @transform_5, window_bounds = array<i64: 1, 128>}, {pipeline_mode = #tpu.pipeline_mode<synchronous>, transform_indices = @transform_6, window_bounds = array<i64: 1, 128>}, {transform_indices = @transform_7, window_bounds = array<i64: 128, 128>}]} {
    %c0_i32 = arith.constant 0 : i32
    %0 = arith.cmpi eq, %arg1, %c0_i32 : i32
    %1 = arith.extui %0 : i1 to i32
    %c0_i32_0 = arith.constant 0 : i32
    %2 = arith.cmpi ne, %1, %c0_i32_0 : i32
    scf.if %2 {
      %cst_16 = arith.constant 0.000000e+00 : f32
      %20 = vector.broadcast %cst_16 : f32 to vector<128x128xf32>
      %c0_17 = arith.constant 0 : index
      %c0_18 = arith.constant 0 : index
      %21 = vector.load %arg10[%c0_17, %c0_18] : memref<128x128xf32, #tpu.memory_space<vmem>>, vector<128x128xf32>
      tpu.vector_store %arg10[%c0_17, %c0_18], %20 {strides = array<i32>} : memref<128x128xf32, #tpu.memory_space<vmem>>, vector<128x128xf32>,
      %c0_19 = arith.constant 0 : index
      %c0_20 = arith.constant 0 : index
      %22 = vector.load %arg2[%c0_19, %c0_20] : memref<128x128xf32, #tpu.memory_space<vmem>>, vector<128x128xf32>
      %23 = arith.truncf %22 : vector<128x128xf32> to vector<128x128xbf16>
      %c0_21 = arith.constant 0 : index
      %c0_22 = arith.constant 0 : index
      %24 = vector.load %arg11[%c0_21, %c0_22] : memref<128x128xbf16, #tpu.memory_space<vmem>>, vector<128x128xbf16>
      tpu.vector_store %arg11[%c0_21, %c0_22], %23 {strides = array<i32>} : memref<128x128xbf16, #tpu.memory_space<vmem>>, vector<128x128xbf16>,
    } else {
    }
    %c0 = arith.constant 0 : index
    %c0_1 = arith.constant 0 : index
    %3 = vector.load %arg11[%c0, %c0_1] : memref<128x128xbf16, #tpu.memory_space<vmem>>, vector<128x128xbf16>
    %c0_2 = arith.constant 0 : index
    %c0_3 = arith.constant 0 : index
    %4 = vector.load %arg3[%c0_2, %c0_3] : memref<128x512xbf16, #tpu.memory_space<vmem>>, vector<128x512xbf16>
    %cst = arith.constant dense<0.000000e+00> : vector<128x512xf32>
    %5 = tpu.matmul %3, %4, %cst {dimension_numbers = #tpu.dot_dimension_numbers<[1], [0], [0], [1], [0, 0, 1, 1], [], []>} : vector<128x128xbf16>, vector<128x512xbf16>, vector<128x512xf32> -> vector<128x512xf32>
    %c0_4 = arith.constant 0 : index
    %c0_5 = arith.constant 0 : index
    %6 = vector.load %arg4[%c0_4, %c0_5] : memref<1x512xf32, #tpu.memory_space<vmem>>, vector<1x512xf32>
    %7 = vector.broadcast %6 : vector<1x512xf32> to vector<128x512xf32>
    %8 = arith.addf %5, %7 : vector<128x512xf32>
    %cst_6 = arith.constant 0.000000e+00 : f32
    %9 = vector.broadcast %cst_6 : f32 to vector<128x512xf32>
    %10 = arith.maximumf %8, %9 : vector<128x512xf32>
    %c0_7 = arith.constant 0 : index
    %c0_8 = arith.constant 0 : index
    %11 = vector.load %arg10[%c0_7, %c0_8] : memref<128x128xf32, #tpu.memory_space<vmem>>, vector<128x128xf32>
    %12 = arith.truncf %10 : vector<128x512xf32> to vector<128x512xbf16>
    %c0_9 = arith.constant 0 : index
    %c0_10 = arith.constant 0 : index
    %13 = vector.load %arg5[%c0_9, %c0_10] : memref<512x128xbf16, #tpu.memory_space<vmem>>, vector<512x128xbf16>
    %cst_11 = arith.constant dense<0.000000e+00> : vector<128x128xf32>
    %14 = tpu.matmul %12, %13, %cst_11 {dimension_numbers = #tpu.dot_dimension_numbers<[1], [0], [0], [1], [0, 0, 1, 1], [], []>} : vector<128x512xbf16>, vector<512x128xbf16>, vector<128x128xf32> -> vector<128x128xf32>
    %15 = arith.addf %11, %14 : vector<128x128xf32>
    %c0_12 = arith.constant 0 : index
    %c0_13 = arith.constant 0 : index
    %16 = vector.load %arg10[%c0_12, %c0_13] : memref<128x128xf32, #tpu.memory_space<vmem>>, vector<128x128xf32>
    tpu.vector_store %arg10[%c0_12, %c0_13], %15 {strides = array<i32>} : memref<128x128xf32, #tpu.memory_space<vmem>>, vector<128x128xf32>,
    %c0_i32_14 = arith.constant 0 : i32
    %17 = arith.cmpi eq, %arg1, %c0_i32_14 : i32
    %18 = arith.extui %17 : i1 to i32
    %c0_i32_15 = arith.constant 0 : i32
    %19 = arith.cmpi ne, %18, %c0_i32_15 : i32
    scf.if %19 {
      %c0_16 = arith.constant 0 : index
      %c0_17 = arith.constant 0 : index
      %20 = vector.load %arg2[%c0_16, %c0_17] : memref<128x128xf32, #tpu.memory_space<vmem>>, vector<128x128xf32>
      %c0_18 = arith.constant 0 : index
      %c0_19 = arith.constant 0 : index
      %21 = vector.load %arg10[%c0_18, %c0_19] : memref<128x128xf32, #tpu.memory_space<vmem>>, vector<128x128xf32>
      %22 = arith.addf %20, %21 : vector<128x128xf32>
      %c0_20 = arith.constant 0 : index
      %c0_21 = arith.constant 0 : index
      %23 = vector.load %arg6[%c0_20, %c0_21] : memref<1x128xf32, #tpu.memory_space<vmem>>, vector<1x128xf32>
      %24 = vector.broadcast %23 : vector<1x128xf32> to vector<128x128xf32>
      %25 = arith.addf %22, %24 : vector<128x128xf32>
      %cst_22 = arith.constant dense<0.000000e+00> : vector<128xf32>
      %26 = vector.multi_reduction <add>, %25, %cst_22 [1] : vector<128x128xf32> to vector<128xf32>
      %27 = vector.shape_cast %26 : vector<128xf32> to vector<128x1xf32>
      %28 = arith.mulf %25, %25 : vector<128x128xf32>
      %cst_23 = arith.constant dense<0.000000e+00> : vector<128xf32>
      %29 = vector.multi_reduction <add>, %28, %cst_23 [1] : vector<128x128xf32> to vector<128xf32>
      %30 = vector.shape_cast %29 : vector<128xf32> to vector<128x1xf32>
      %cst_24 = arith.constant 7.812500e-03 : f32
      %31 = vector.broadcast %cst_24 : f32 to vector<128x1xf32>
      %32 = arith.mulf %27, %31 : vector<128x1xf32>
      %cst_25 = arith.constant 7.812500e-03 : f32
      %33 = vector.broadcast %cst_25 : f32 to vector<128x1xf32>
      %34 = arith.mulf %30, %33 : vector<128x1xf32>
      %35 = arith.mulf %32, %32 : vector<128x1xf32>
      %36 = arith.subf %34, %35 : vector<128x1xf32>
      %cst_26 = arith.constant 0.000000e+00 : f32
      %37 = vector.broadcast %cst_26 : f32 to vector<128x1xf32>
      %38 = arith.maximumf %36, %37 : vector<128x1xf32>
      %cst_27 = arith.constant 9.99999974E-6 : f32
      %39 = vector.broadcast %cst_27 : f32 to vector<128x1xf32>
      %40 = arith.addf %38, %39 : vector<128x1xf32>
      %41 = math.rsqrt %40 : vector<128x1xf32>
      %42 = vector.broadcast %32 : vector<128x1xf32> to vector<128x128xf32>
      %43 = arith.subf %25, %42 : vector<128x128xf32>
      %44 = vector.broadcast %41 : vector<128x1xf32> to vector<128x128xf32>
      %45 = arith.mulf %43, %44 : vector<128x128xf32>
      %c0_28 = arith.constant 0 : index
      %c0_29 = arith.constant 0 : index
      %46 = vector.load %arg7[%c0_28, %c0_29] : memref<1x128xf32, #tpu.memory_space<vmem>>, vector<1x128xf32>
      %47 = vector.broadcast %46 : vector<1x128xf32> to vector<128x128xf32>
      %48 = arith.mulf %45, %47 : vector<128x128xf32>
      %c0_30 = arith.constant 0 : index
      %c0_31 = arith.constant 0 : index
      %49 = vector.load %arg8[%c0_30, %c0_31] : memref<1x128xf32, #tpu.memory_space<vmem>>, vector<1x128xf32>
      %50 = vector.broadcast %49 : vector<1x128xf32> to vector<128x128xf32>
      %51 = arith.addf %48, %50 : vector<128x128xf32>
      %c0_32 = arith.constant 0 : index
      %c0_33 = arith.constant 0 : index
      %52 = vector.load %arg9[%c0_32, %c0_33] : memref<128x128xf32, #tpu.memory_space<vmem>>, vector<128x128xf32>
      tpu.vector_store %arg9[%c0_32, %c0_33], %51 {strides = array<i32>} : memref<128x128xf32, #tpu.memory_space<vmem>>, vector<128x128xf32>,
    } else {
    }
    return
  }
  func.func @transform_0(%arg0: i32, %arg1: i32) -> (i32, i32) {
    %c0_i32 = arith.constant 0 : i32
    %c0_i32_0 = arith.constant 0 : i32
    return %arg0, %c0_i32 : i32, i32
  }
  func.func @transform_1(%arg0: i32, %arg1: i32) -> (i32, i32) {
    %c0_i32 = arith.constant 0 : i32
    %c0_i32_0 = arith.constant 0 : i32
    return %c0_i32, %arg1 : i32, i32
  }
  func.func @transform_2(%arg0: i32, %arg1: i32) -> (i32, i32) {
    %c0_i32 = arith.constant 0 : i32
    %c0_i32_0 = arith.constant 0 : i32
    return %c0_i32, %arg1 : i32, i32
  }
  func.func @transform_3(%arg0: i32, %arg1: i32) -> (i32, i32) {
    %c0_i32 = arith.constant 0 : i32
    %c0_i32_0 = arith.constant 0 : i32
    return %arg1, %c0_i32 : i32, i32
  }
  func.func @transform_4(%arg0: i32, %arg1: i32) -> (i32, i32) {
    %c0_i32 = arith.constant 0 : i32
    %c0_i32_0 = arith.constant 0 : i32
    %c0_i32_1 = arith.constant 0 : i32
    return %c0_i32, %c0_i32_0 : i32, i32
  }
  func.func @transform_5(%arg0: i32, %arg1: i32) -> (i32, i32) {
    %c0_i32 = arith.constant 0 : i32
    %c0_i32_0 = arith.constant 0 : i32
    %c0_i32_1 = arith.constant 0 : i32
    return %c0_i32, %c0_i32_0 : i32, i32
  }
  func.func @transform_6(%arg0: i32, %arg1: i32) -> (i32, i32) {
    %c0_i32 = arith.constant 0 : i32
    %c0_i32_0 = arith.constant 0 : i32
    %c0_i32_1 = arith.constant 0 : i32
    return %c0_i32, %c0_i32_0 : i32, i32
  }
  func.func @transform_7(%arg0: i32, %arg1: i32) -> (i32, i32) {
    %c0_i32 = arith.constant 0 : i32
    %c0_i32_0 = arith.constant 0 : i32
    return %arg0, %c0_i32 : i32, i32
  }
}

</mosaic_0001>

<llo_original>
// kernel: _ffn_pallas.1
$region0: #{_ffn_pallas.1}
  #allocation0 [shape = 'u32[]', space=smem, size = 0x4, offset = 0x4, fixed_abs, tag = 'smem constant byte address 0x4 - core index']
  #allocation1 [shape = 'u32[144,128]{1,0:T(1,128)}', space=vmem, size = 0x12000, scoped, tag = 'internal scratch']
  #allocation2 [shape = 'f32[128,128]{1,0:T(8,128)}', space=vmem, size = 0x10000, scoped, tag = 'scratch operand']
  #allocation3 [shape = 'bf16[128,128]{1,0:T(8,128)(2,1)}', space=vmem, size = 0x8000, scoped, tag = 'scratch operand']
  %s0 = inlined_call_operand.vmem [shape: f32[256,128], index: 0, kind: input, shape index: {}]
  %s1 = inlined_call_operand.vmem [shape: bf16[128,512], index: 1, kind: input, shape index: {}]
  %s2 = inlined_call_operand.vmem [shape: f32[1,512], index: 2, kind: input, shape index: {}]
  %s3 = inlined_call_operand.vmem [shape: bf16[512,128], index: 3, kind: input, shape index: {}]
  %s4 = inlined_call_operand.vmem [shape: f32[1,128], index: 4, kind: input, shape index: {}]
  %s5 = inlined_call_operand.vmem [shape: f32[1,128], index: 5, kind: input, shape index: {}]
  %s6 = inlined_call_operand.vmem [shape: f32[1,128], index: 6, kind: input, shape index: {}]
  %s7 = inlined_call_operand.hbm [shape: f32[256,128], index: 7, kind: output, shape index: {}]
  %s8 = sld [smem:[#allocation0]]
  $region69: #{_ffn_pallas.1} parent=0
    _
  %s10 = ssub.s32 1, %s8
  %s11 = scalar_select 0, %s10, %s8
  $region1: #{_ffn_pallas.1} parent=0
    #allocation4 [shape = 'u8[131072]{0}', space=vmem, size = 0x20000, scoped, tag = 'output window, operand 0']
    #allocation5 [shape = 's32[2]{0}', space=sflag, size = 0x8, scoped, tag = 'scoped memory for _ffn_pallas.1']
    %12 = vsyncpa [#allocation5], 0
    %s13 = scalar_lea.sflag [#allocation5], 1
    %14 = vsyncpa %s13, 0
    loop: start=0, step=1, limit=4
    $region2: #{_ffn_pallas.1} parent=1 // loop_pre_header
      _
    $region3: #{_ffn_pallas.1} parent=1 // loop_header
      %s16 = sphi 0, %s20
      %p17 = scmp.ge.s32.totalorder %s16, 4
      %s23 = sphi 0, %s35
      %s24 = sphi 0, %s31
      %s25 = sphi 0, %s23
      %s26 = sphi 0, %s24
      %s27 = sphi 0, %s25
      %s28 = sphi 0, %s26
      %s38 = sphi 0, %s40
      %s41 = sphi 0, %s38
      %s42 = sphi 0, %s41
      %s58 = sphi 0, %s42
      %s64 = sphi 0, %s66
      %s67 = sphi 0, %s64
      %s68 = sphi 0, %s67
      %s84 = sphi 0, %s68
      %s90 = sphi 0, %s92
      %s93 = sphi 0, %s90
      %s94 = sphi 0, %s93
      %s110 = sphi 0, %s94
      %s116 = sphi 0, %s118
      %s119 = sphi 0, %s116
      %s120 = sphi 0, %s119
      %s136 = sphi 0, %s120
      %s140 = sphi 0, %s140
      %s142 = sphi 0, %s140
      %s143 = sphi 0, %s142
      %s157 = sphi 0, %s143
      %s161 = sphi 0, %s161
      %s163 = sphi 0, %s161
      %s164 = sphi 0, %s163
      %s178 = sphi 0, %s164
      %s182 = sphi 0, %s182
      %s184 = sphi 0, %s182
      %s185 = sphi 0, %s184
      %s199 = sphi 0, %s185
      %s205 = sphi 0, %s207
      %s208 = sphi 0, %s205
      %s209 = sphi 0, %s208
      %s225 = sphi 0, %s209
    $region4: #{_ffn_pallas.1} parent=1 // loop_header_branch
      %19 = sbr.rel (%p17) target = $region8
    $region5: #{_ffn_pallas.1} parent=1 // loop_body
      %s21 = ssub.s32 %s16, 1
      %s22 = ssub.s32 %s16, 2
      %s29 = sadd.s32 1, %s24
      %p30 = scmp.ge.s32.totalorder %s29, 1
      %s31 = scalar_select %p30, 0, %s29
      %s32 = sadd.s32 1, %s23
      %s33 = scalar_select %p30, %s32, %s23
      %p34 = scmp.ge.s32.totalorder %s33, 2
      %s35 = scalar_select %p34, 0, %s33
      %s36 = ssub.s32 %s23, %s35
      %p37 = scmp.eq.s32.totalorder %s36, 0
      %s39 = sadd.s32 %s38, 1
      %s40 = scalar_select %p37, %s38, %s39
      %p43 = pneg %p37
      %p44 = scmp.eq.s32.totalorder %s16, 1
      %p45 = por %p43, %p44
      %p46 = scmp.ne.s32.totalorder %s38, %s41
      %p47 = scmp.eq.s32.totalorder %s16, 0
      %p48 = por %p46, %p47
      %p49 = scmp.ne.s32.totalorder %s38, %s41
      %p50 = scmp.eq.s32.totalorder %s21, 1
      %p51 = por %p49, %p50
      %p52 = scmp.ne.s32.totalorder %s41, %s42
      %p53 = scmp.eq.s32.totalorder %s21, 0
      %p54 = por %p52, %p53
      %p55 = scmp.ne.s32.totalorder %s41, %s42
      %p56 = scmp.eq.s32.totalorder %s22, 1
      %p57 = por %p55, %p56
      %p59 = scmp.ne.s32.totalorder %s42, %s58
      %p60 = scmp.eq.s32.totalorder %s22, 0
      %p61 = por %p59, %p60
      %s62 = ssub.s32 %s24, %s31
      %p63 = scmp.eq.s32.totalorder %s62, 0
      %s65 = sadd.s32 %s64, 1
      %s66 = scalar_select %p63, %s64, %s65
      %p69 = pneg %p63
      %p70 = scmp.eq.s32.totalorder %s16, 1
      %p71 = por %p69, %p70
      %p72 = scmp.ne.s32.totalorder %s64, %s67
      %p73 = scmp.eq.s32.totalorder %s16, 0
      %p74 = por %p72, %p73
      %p75 = scmp.ne.s32.totalorder %s64, %s67
      %p76 = scmp.eq.s32.totalorder %s21, 1
      %p77 = por %p75, %p76
      %p78 = scmp.ne.s32.totalorder %s67, %s68
      %p79 = scmp.eq.s32.totalorder %s21, 0
      %p80 = por %p78, %p79
      %p81 = scmp.ne.s32.totalorder %s67, %s68
      %p82 = scmp.eq.s32.totalorder %s22, 1
      %p83 = por %p81, %p82
      %p85 = scmp.ne.s32.totalorder %s68, %s84
      %p86 = scmp.eq.s32.totalorder %s22, 0
      %p87 = por %p85, %p86
      %s88 = ssub.s32 %s24, %s31
      %p89 = scmp.eq.s32.totalorder %s88, 0
      %s91 = sadd.s32 %s90, 1
      %s92 = scalar_select %p89, %s90, %s91
      %p95 = pneg %p89
      %p96 = scmp.eq.s32.totalorder %s16, 1
      %p97 = por %p95, %p96
      %p98 = scmp.ne.s32.totalorder %s90, %s93
      %p99 = scmp.eq.s32.totalorder %s16, 0
      %p100 = por %p98, %p99
      %p101 = scmp.ne.s32.totalorder %s90, %s93
      %p102 = scmp.eq.s32.totalorder %s21, 1
      %p103 = por %p101, %p102
      %p104 = scmp.ne.s32.totalorder %s93, %s94
      %p105 = scmp.eq.s32.totalorder %s21, 0
      %p106 = por %p104, %p105
      %p107 = scmp.ne.s32.totalorder %s93, %s94
      %p108 = scmp.eq.s32.totalorder %s22, 1
      %p109 = por %p107, %p108
      %p111 = scmp.ne.s32.totalorder %s94, %s110
      %p112 = scmp.eq.s32.totalorder %s22, 0
      %p113 = por %p111, %p112
      %s114 = ssub.s32 %s24, %s31
      %p115 = scmp.eq.s32.totalorder %s114, 0
      %s117 = sadd.s32 %s116, 1
      %s118 = scalar_select %p115, %s116, %s117
      %p121 = pneg %p115
      %p122 = scmp.eq.s32.totalorder %s16, 1
      %p123 = por %p121, %p122
      %p124 = scmp.ne.s32.totalorder %s116, %s119
      %p125 = scmp.eq.s32.totalorder %s16, 0
      %p126 = por %p124, %p125
      %p127 = scmp.ne.s32.totalorder %s116, %s119
      %p128 = scmp.eq.s32.totalorder %s21, 1
      %p129 = por %p127, %p128
      %p130 = scmp.ne.s32.totalorder %s119, %s120
      %p131 = scmp.eq.s32.totalorder %s21, 0
      %p132 = por %p130, %p131
      %p133 = scmp.ne.s32.totalorder %s119, %s120
      %p134 = scmp.eq.s32.totalorder %s22, 1
      %p135 = por %p133, %p134
      %p137 = scmp.ne.s32.totalorder %s120, %s136
      %p138 = scmp.eq.s32.totalorder %s22, 0
      %p139 = por %p137, %p138
      %s141 = sadd.s32 %s140, 1
      %p144 = scmp.eq.s32.totalorder %s16, 1
      %p145 = scmp.ne.s32.totalorder %s140, %s142
      %p146 = scmp.eq.s32.totalorder %s16, 0
      %p147 = por %p145, %p146
      %p148 = scmp.ne.s32.totalorder %s140, %s142
      %p149 = scmp.eq.s32.totalorder %s21, 1
      %p150 = por %p148, %p149
      %p151 = scmp.ne.s32.totalorder %s142, %s143
      %p152 = scmp.eq.s32.totalorder %s21, 0
      %p153 = por %p151, %p152
      %p154 = scmp.ne.s32.totalorder %s142, %s143
      %p155 = scmp.eq.s32.totalorder %s22, 1
      %p156 = por %p154, %p155
      %p158 = scmp.ne.s32.totalorder %s143, %s157
      %p159 = scmp.eq.s32.totalorder %s22, 0
      %p160 = por %p158, %p159
      %s162 = sadd.s32 %s161, 1
      %p165 = scmp.eq.s32.totalorder %s16, 1
      %p166 = scmp.ne.s32.totalorder %s161, %s163
      %p167 = scmp.eq.s32.totalorder %s16, 0
      %p168 = por %p166, %p167
      %p169 = scmp.ne.s32.totalorder %s161, %s163
      %p170 = scmp.eq.s32.totalorder %s21, 1
      %p171 = por %p169, %p170
      %p172 = scmp.ne.s32.totalorder %s163, %s164
      %p173 = scmp.eq.s32.totalorder %s21, 0
      %p174 = por %p172, %p173
      %p175 = scmp.ne.s32.totalorder %s163, %s164
      %p176 = scmp.eq.s32.totalorder %s22, 1
      %p177 = por %p175, %p176
      %p179 = scmp.ne.s32.totalorder %s164, %s178
      %p180 = scmp.eq.s32.totalorder %s22, 0
      %p181 = por %p179, %p180
      %s183 = sadd.s32 %s182, 1
      %p186 = scmp.eq.s32.totalorder %s16, 1
      %p187 = scmp.ne.s32.totalorder %s182, %s184
      %p188 = scmp.eq.s32.totalorder %s16, 0
      %p189 = por %p187, %p188
      %p190 = scmp.ne.s32.totalorder %s182, %s184
      %p191 = scmp.eq.s32.totalorder %s21, 1
      %p192 = por %p190, %p191
      %p193 = scmp.ne.s32.totalorder %s184, %s185
      %p194 = scmp.eq.s32.totalorder %s21, 0
      %p195 = por %p193, %p194
      %p196 = scmp.ne.s32.totalorder %s184, %s185
      %p197 = scmp.eq.s32.totalorder %s22, 1
      %p198 = por %p196, %p197
      %p200 = scmp.ne.s32.totalorder %s185, %s199
      %p201 = scmp.eq.s32.totalorder %s22, 0
      %p202 = por %p200, %p201
      %s203 = ssub.s32 %s23, %s35
      %p204 = scmp.eq.s32.totalorder %s203, 0
      %s206 = sadd.s32 %s205, 1
      %s207 = scalar_select %p204, %s205, %s206
      %p210 = pneg %p204
      %p211 = scmp.eq.s32.totalorder %s16, 1
      %p212 = por %p210, %p211
      %p213 = scmp.ne.s32.totalorder %s205, %s208
      %p214 = scmp.eq.s32.totalorder %s16, 0
      %p215 = por %p213, %p214
      %p216 = scmp.ne.s32.totalorder %s205, %s208
      %p217 = scmp.eq.s32.totalorder %s21, 1
      %p218 = por %p216, %p217
      %p219 = scmp.ne.s32.totalorder %s208, %s209
      %p220 = scmp.eq.s32.totalorder %s21, 0
      %p221 = por %p219, %p220
      %p222 = scmp.ne.s32.totalorder %s208, %s209
      %p223 = scmp.eq.s32.totalorder %s22, 1
      %p224 = por %p222, %p223
      %p226 = scmp.ne.s32.totalorder %s209, %s225
      %p227 = scmp.eq.s32.totalorder %s22, 0
      %p228 = por %p226, %p227
      %p229 = scmp.le.s32.totalorder 1, %s16
      %p230 = scmp.lt.s32.totalorder %s16, 3
      %p231 = pnand %p229, %p230
      %p232 = pneg %p231
      // Predicated region
      $region9: #{_ffn_pallas.1} parent=5 // pred_check
        _
      $region10: #{_ffn_pallas.1} parent=5 // pred_check_branch
        %234 = sbr.rel (%p231) target = $region12
      $region11: #{_ffn_pallas.1} parent=5 // pred_region
        %s235 = ssub.s32 %s16, 1
        // Predicated region
        $region13: #{_ffn_pallas.1} parent=11 // pred_check
          %p236 = pneg %p80
        $region14: #{_ffn_pallas.1} parent=11 // pred_check_branch
          %238 = sbr.rel (%p236) target = $region16
        $region15: #{_ffn_pallas.1} parent=11 // pred_region
          %s239 = smul.u32 4, %s26
          %p240 = scmp.lt.s32.totalorder %s239, 3
          %s241 = scalar_select %p240, %s239, 3
          %s242 = smul.addr %s241, 4
          %s243 = scalar_lea.vmem %s1, %s242
          %s244 = smul.u32 4, %s26
        $region16: #{_ffn_pallas.1} parent=11 // pred_fallthru
          _
        // Predicated region
        $region17: #{_ffn_pallas.1} parent=11 // pred_check
          %p245 = pneg %p106
        $region18: #{_ffn_pallas.1} parent=11 // pred_check_branch
          %247 = sbr.rel (%p245) target = $region20
        $region19: #{_ffn_pallas.1} parent=11 // pred_region
          %s248 = smul.u32 4, %s26
          %p249 = scmp.lt.s32.totalorder %s248, 3
          %s250 = scalar_select %p249, %s248, 3
          %s251 = scalar_lea.vmem %s2, %s250
          %s252 = smul.u32 4, %s26
        $region20: #{_ffn_pallas.1} parent=11 // pred_fallthru
          _
        // Predicated region
        $region21: #{_ffn_pallas.1} parent=11 // pred_check
          %p253 = pneg %p132
        $region22: #{_ffn_pallas.1} parent=11 // pred_check_branch
          %255 = sbr.rel (%p253) target = $region24
        $region23: #{_ffn_pallas.1} parent=11 // pred_region
          %s256 = smul.u32 64, %s26
          %p257 = scmp.lt.s32.totalorder %s256, 63
          %s258 = scalar_select %p257, %s256, 63
          %s259 = smul.addr %s258, 4
          %s260 = scalar_lea.vmem %s3, %s259
          %s261 = smul.u32 64, %s26
        $region24: #{_ffn_pallas.1} parent=11 // pred_fallthru
          _
        // Predicated region
        $region25: #{_ffn_pallas.1} parent=11 // pred_check
          %p262 = pneg %p153
        $region26: #{_ffn_pallas.1} parent=11 // pred_check_branch
          %264 = sbr.rel (%p262) target = $region28
        $region27: #{_ffn_pallas.1} parent=11 // pred_region
          _
        $region28: #{_ffn_pallas.1} parent=11 // pred_fallthru
          _
        // Predicated region
        $region29: #{_ffn_pallas.1} parent=11 // pred_check
          %p265 = pneg %p174
        $region30: #{_ffn_pallas.1} parent=11 // pred_check_branch
          %267 = sbr.rel (%p265) target = $region32
        $region31: #{_ffn_pallas.1} parent=11 // pred_region
          _
        $region32: #{_ffn_pallas.1} parent=11 // pred_fallthru
          _
        // Predicated region
        $region33: #{_ffn_pallas.1} parent=11 // pred_check
          %p268 = pneg %p195
        $region34: #{_ffn_pallas.1} parent=11 // pred_check_branch
          %270 = sbr.rel (%p268) target = $region36
        $region35: #{_ffn_pallas.1} parent=11 // pred_region
          _
        $region36: #{_ffn_pallas.1} parent=11 // pred_fallthru
          _
      $region12: #{_ffn_pallas.1} parent=5 // pred_fallthru
        _
      %p271 = scmp.lt.s32.totalorder %s16, 2
      // Predicated region
      $region37: #{_ffn_pallas.1} parent=5 // pred_check
        %p272 = pneg %p271
      $region38: #{_ffn_pallas.1} parent=5 // pred_check_branch
        %274 = sbr.rel (%p272) target = $region40
      $region39: #{_ffn_pallas.1} parent=5 // pred_region
        // Predicated region
        $region41: #{_ffn_pallas.1} parent=39 // pred_check
          %p275 = pneg %p48
        $region42: #{_ffn_pallas.1} parent=39 // pred_check_branch
          %277 = sbr.rel (%p275) target = $region44
        $region43: #{_ffn_pallas.1} parent=39 // pred_region
          %s278 = smul.u32 16, %s23
          %p279 = scmp.lt.s32.totalorder %s278, 31
          %s280 = scalar_select %p279, %s278, 31
          %s281 = smul.addr %s280, 8
          %s282 = scalar_lea.vmem %s0, %s281
          %s283 = smul.u32 16, %s23
        $region44: #{_ffn_pallas.1} parent=39 // pred_fallthru
          _
      $region40: #{_ffn_pallas.1} parent=5 // pred_fallthru
        _
      %p284 = scmp.le.s32.totalorder 1, %s16
      %p285 = scmp.lt.s32.totalorder %s16, 3
      %p286 = pnand %p284, %p285
      %p287 = pneg %p286
      // Predicated region
      $region45: #{_ffn_pallas.1} parent=5 // pred_check
        _
      $region46: #{_ffn_pallas.1} parent=5 // pred_check_branch
        %289 = sbr.rel (%p286) target = $region48
      $region47: #{_ffn_pallas.1} parent=5 // pred_region
        %s290 = ssub.s32 %s16, 1
        %s291 = smul.u32 16, %s25
        %p292 = scmp.lt.s32.totalorder %s291, 31
        %s293 = scalar_select %p292, %s291, 31
        %s294 = smul.addr %s293, 8
        %s295 = scalar_lea.vmem %s0, %s294
        %p296 = pneg %p54
        %p297 = pneg %p51
        %s298 = smul.u32 4, %s26
        %p299 = scmp.lt.s32.totalorder %s298, 3
        %s300 = scalar_select %p299, %s298, 3
        %s301 = smul.addr %s300, 4
        %s302 = scalar_lea.vmem %s1, %s301
        %p303 = pneg %p80
        %p304 = pneg %p77
        %s305 = smul.u32 4, %s26
        %p306 = scmp.lt.s32.totalorder %s305, 3
        %s307 = scalar_select %p306, %s305, 3
        %s308 = scalar_lea.vmem %s2, %s307
        %p309 = pneg %p106
        %p310 = pneg %p103
        %s311 = smul.u32 64, %s26
        %p312 = scmp.lt.s32.totalorder %s311, 63
        %s313 = scalar_select %p312, %s311, 63
        %s314 = smul.addr %s313, 4
        %s315 = scalar_lea.vmem %s3, %s314
        %p316 = pneg %p132
        %p317 = pneg %p129
        %p318 = pneg %p153
        %p319 = pneg %p150
        %p320 = pneg %p174
        %p321 = pneg %p171
        %p322 = pneg %p195
        %p323 = pneg %p192
        %p324 = pneg %p221
        %p325 = pneg %p218
        %s326 = sand.u32 %s208, 1
        %s327 = scalar_lea.sflag [#allocation5], %s326
        %s328 = sand.u32 %s208, 1
        %s329 = smul.addr %s328, 128
        %s330 = scalar_lea.vmem [#allocation4], %s329
        %s331 = smul.u32 16, %s25
        %p332 = scmp.lt.s32.totalorder %s331, 31
        %s333 = scalar_select %p332, %s331, 31
        %s334 = smul.addr %s333, 8
        %s335 = scalar_lea.vmem %s0, %s334
        %s336 = smul.u32 16, %s25
        %s337 = smul.u32 4, %s26
        %p338 = scmp.lt.s32.totalorder %s337, 3
        %s339 = scalar_select %p338, %s337, 3
        %s340 = smul.addr %s339, 4
        %s341 = scalar_lea.vmem %s1, %s340
        %s342 = smul.u32 4, %s26
        %s343 = smul.u32 4, %s26
        %p344 = scmp.lt.s32.totalorder %s343, 3
        %s345 = scalar_select %p344, %s343, 3
        %s346 = scalar_lea.vmem %s2, %s345
        %s347 = smul.u32 4, %s26
        %s348 = smul.u32 64, %s26
        %p349 = scmp.lt.s32.totalorder %s348, 63
        %s350 = scalar_select %p349, %s348, 63
        %s351 = smul.addr %s350, 4
        %s352 = scalar_lea.vmem %s3, %s351
        %s353 = smul.u32 64, %s26
        %s354 = smul.u32 16, %s25
        %p356 = scmp.eq.s32.totalorder %s26, 0
        // Predicated region
        $region49: #{_ffn_pallas.1} parent=47 // pred_check
          %p357 = pneg %p356
        $region50: #{_ffn_pallas.1} parent=47 // pred_check_branch
          %359 = sbr.rel (%p357) target = $region52
        $region51: #{_ffn_pallas.1} parent=47 // pred_region
          %360 = vst [vmem:[#allocation2] sm:$0xff] 0.0
          %361 = vst [vmem:[#allocation2 + $0x8] sm:$0xff] 0.0
          %362 = vst [vmem:[#allocation2 + $0x10] sm:$0xff] 0.0
          %363 = vst [vmem:[#allocation2 + $0x18] sm:$0xff] 0.0
          %364 = vst [vmem:[#allocation2 + $0x20] sm:$0xff] 0.0
          %365 = vst [vmem:[#allocation2 + $0x28] sm:$0xff] 0.0
          %366 = vst [vmem:[#allocation2 + $0x30] sm:$0xff] 0.0
          %367 = vst [vmem:[#allocation2 + $0x38] sm:$0xff] 0.0
          %368 = vst [vmem:[#allocation2 + $0x40] sm:$0xff] 0.0
          %369 = vst [vmem:[#allocation2 + $0x48] sm:$0xff] 0.0
          %370 = vst [vmem:[#allocation2 + $0x50] sm:$0xff] 0.0
          %371 = vst [vmem:[#allocation2 + $0x58] sm:$0xff] 0.0
          %372 = vst [vmem:[#allocation2 + $0x60] sm:$0xff] 0.0
          %373 = vst [vmem:[#allocation2 + $0x68] sm:$0xff] 0.0
          %374 = vst [vmem:[#allocation2 + $0x70] sm:$0xff] 0.0
          %375 = vst [vmem:[#allocation2 + $0x78] sm:$0xff] 0.0
          %v376 = vld [vmem:[%s335] sm:$0xff]
          %v377 = vld [vmem:[%s335 + $0x8] sm:$0xff]
          %v378 = vld [vmem:[%s335 + $0x10] sm:$0xff]
          %v379 = vld [vmem:[%s335 + $0x18] sm:$0xff]
          %v380 = vld [vmem:[%s335 + $0x20] sm:$0xff]
          %v381 = vld [vmem:[%s335 + $0x28] sm:$0xff]
          %v382 = vld [vmem:[%s335 + $0x30] sm:$0xff]
          %v383 = vld [vmem:[%s335 + $0x38] sm:$0xff]
          %v384 = vld [vmem:[%s335 + $0x40] sm:$0xff]
          %v385 = vld [vmem:[%s335 + $0x48] sm:$0xff]
          %v386 = vld [vmem:[%s335 + $0x50] sm:$0xff]
          %v387 = vld [vmem:[%s335 + $0x58] sm:$0xff]
          %v388 = vld [vmem:[%s335 + $0x60] sm:$0xff]
          %v389 = vld [vmem:[%s335 + $0x68] sm:$0xff]
          %v390 = vld [vmem:[%s335 + $0x70] sm:$0xff]
          %v391 = vld [vmem:[%s335 + $0x78] sm:$0xff]
          %v392 = vpack.c.bf16 %v377, %v376
          %v393 = vpack.c.bf16 %v379, %v378
          %v394 = vpack.c.bf16 %v381, %v380
          %v395 = vpack.c.bf16 %v383, %v382
          %v396 = vpack.c.bf16 %v385, %v384
          %v397 = vpack.c.bf16 %v387, %v386
          %v398 = vpack.c.bf16 %v389, %v388
          %v399 = vpack.c.bf16 %v391, %v390
          %v408 = vunpack.c.l.b16 %v392
          %v409 = vunpack.c.h.b16 %v392
          %v410 = vunpack.c.l.b16 %v393
          %v411 = vunpack.c.h.b16 %v393
          %v412 = vunpack.c.l.b16 %v394
          %v413 = vunpack.c.h.b16 %v394
          %v414 = vunpack.c.l.b16 %v395
          %v415 = vunpack.c.h.b16 %v395
          %v416 = vunpack.c.l.b16 %v396
          %v417 = vunpack.c.h.b16 %v396
          %v418 = vunpack.c.l.b16 %v397
          %v419 = vunpack.c.h.b16 %v397
          %v420 = vunpack.c.l.b16 %v398
          %v421 = vunpack.c.h.b16 %v398
          %v422 = vunpack.c.l.b16 %v399
          %v423 = vunpack.c.h.b16 %v399
          %v424 = vpack.c.b16 %v408, %v408
          %v425 = vpack.c.b16 %v409, %v409
          %v426 = vpack.c.b16 %v410, %v410
          %v427 = vpack.c.b16 %v411, %v411
          %v428 = vpack.c.b16 %v412, %v412
          %v429 = vpack.c.b16 %v413, %v413
          %v430 = vpack.c.b16 %v414, %v414
          %v431 = vpack.c.b16 %v415, %v415
          %v432 = vpack.c.b16 %v416, %v416
          %v433 = vpack.c.b16 %v417, %v417
          %v434 = vpack.c.b16 %v418, %v418
          %v435 = vpack.c.b16 %v419, %v419
          %v436 = vpack.c.b16 %v420, %v420
          %v437 = vpack.c.b16 %v421, %v421
          %v438 = vpack.c.b16 %v422, %v422
          %v439 = vpack.c.b16 %v423, %v423
          %456 = vst [vmem:[#allocation3] sm:$0xf] %v424
          %457 = vst [vmem:[#allocation3 + $0x4] sm:$0xf] %v425
          %458 = vst [vmem:[#allocation3 + $0x8] sm:$0xf] %v426
          %459 = vst [vmem:[#allocation3 + $0xc] sm:$0xf] %v427
          %460 = vst [vmem:[#allocation3 + $0x10] sm:$0xf] %v428
          %461 = vst [vmem:[#allocation3 + $0x14] sm:$0xf] %v429
          %462 = vst [vmem:[#allocation3 + $0x18] sm:$0xf] %v430
          %463 = vst [vmem:[#allocation3 + $0x1c] sm:$0xf] %v431
          %464 = vst [vmem:[#allocation3 + $0x20] sm:$0xf] %v432
          %465 = vst [vmem:[#allocation3 + $0x24] sm:$0xf] %v433
          %466 = vst [vmem:[#allocation3 + $0x28] sm:$0xf] %v434
          %467 = vst [vmem:[#allocation3 + $0x2c] sm:$0xf] %v435
          %468 = vst [vmem:[#allocation3 + $0x30] sm:$0xf] %v436
          %469 = vst [vmem:[#allocation3 + $0x34] sm:$0xf] %v437
          %470 = vst [vmem:[#allocation3 + $0x38] sm:$0xf] %v438
          %471 = vst [vmem:[#allocation3 + $0x3c] sm:$0xf] %v439
        $region52: #{_ffn_pallas.1} parent=47 // pred_fallthru
          _
        %v472 = vld [vmem:[#allocation3] sm:$0xf]
        %v473 = vld [vmem:[#allocation3 + $0x4] sm:$0xf]
        %v474 = vld [vmem:[#allocation3 + $0x8] sm:$0xf]
        %v475 = vld [vmem:[#allocation3 + $0xc] sm:$0xf]
        %v476 = vld [vmem:[#allocation3 + $0x10] sm:$0xf]
        %v477 = vld [vmem:[#allocation3 + $0x14] sm:$0xf]
        %v478 = vld [vmem:[#allocation3 + $0x18] sm:$0xf]
        %v479 = vld [vmem:[#allocation3 + $0x1c] sm:$0xf]
        %v480 = vld [vmem:[#allocation3 + $0x20] sm:$0xf]
        %v481 = vld [vmem:[#allocation3 + $0x24] sm:$0xf]
        %v482 = vld [vmem:[#allocation3 + $0x28] sm:$0xf]
        %v483 = vld [vmem:[#allocation3 + $0x2c] sm:$0xf]
        %v484 = vld [vmem:[#allocation3 + $0x30] sm:$0xf]
        %v485 = vld [vmem:[#allocation3 + $0x34] sm:$0xf]
        %v486 = vld [vmem:[#allocation3 + $0x38] sm:$0xf]
        %v487 = vld [vmem:[#allocation3 + $0x3c] sm:$0xf]
        %v488 = vld [vmem:[%s341] sm:$0xff]
        %v489 = vld [vmem:[%s341 + $0x8] sm:$0xff]
        %v490 = vld [vmem:[%s341 + $0x10] sm:$0xff]
        %v491 = vld [vmem:[%s341 + $0x18] sm:$0xff]
        %v492 = vld [vmem:[%s341 + $0x20] sm:$0xff]
        %v493 = vld [vmem:[%s341 + $0x28] sm:$0xff]
        %v494 = vld [vmem:[%s341 + $0x30] sm:$0xff]
        %v495 = vld [vmem:[%s341 + $0x38] sm:$0xff]
        %v496 = vld [vmem:[%s341 + $0x40] sm:$0xff]
        %v497 = vld [vmem:[%s341 + $0x48] sm:$0xff]
        %v498 = vld [vmem:[%s341 + $0x50] sm:$0xff]
        %v499 = vld [vmem:[%s341 + $0x58] sm:$0xff]
        %v500 = vld [vmem:[%s341 + $0x60] sm:$0xff]
        %v501 = vld [vmem:[%s341 + $0x68] sm:$0xff]
        %v502 = vld [vmem:[%s341 + $0x70] sm:$0xff]
        %v503 = vld [vmem:[%s341 + $0x78] sm:$0xff]
        %v504 = vld [vmem:[%s341 + $0x80] sm:$0xff]
        %v505 = vld [vmem:[%s341 + $0x88] sm:$0xff]
        %v506 = vld [vmem:[%s341 + $0x90] sm:$0xff]
        %v507 = vld [vmem:[%s341 + $0x98] sm:$0xff]
        %v508 = vld [vmem:[%s341 + $0xa0] sm:$0xff]
        %v509 = vld [vmem:[%s341 + $0xa8] sm:$0xff]
        %v510 = vld [vmem:[%s341 + $0xb0] sm:$0xff]
        %v511 = vld [vmem:[%s341 + $0xb8] sm:$0xff]
        %v512 = vld [vmem:[%s341 + $0xc0] sm:$0xff]
        %v513 = vld [vmem:[%s341 + $0xc8] sm:$0xff]
        %v514 = vld [vmem:[%s341 + $0xd0] sm:$0xff]
        %v515 = vld [vmem:[%s341 + $0xd8] sm:$0xff]
        %v516 = vld [vmem:[%s341 + $0xe0] sm:$0xff]
        %v517 = vld [vmem:[%s341 + $0xe8] sm:$0xff]
        %v518 = vld [vmem:[%s341 + $0xf0] sm:$0xff]
        %v519 = vld [vmem:[%s341 + $0xf8] sm:$0xff]
        %v520 = vld [vmem:[%s346] sm:$0xf]
        %v522 = vlaneseq
        %v523 = vshrl.u32 %v522, 7
        %v524 = vsub.s32 0, %v523
        %v525 = vrot.slane %v520, %v524
        %v526 = vlaneseq
        %v527 = vshrl.u32 %v526, 7
        %v528 = vsub.s32 1, %v527
        %v529 = vrot.slane %v520, %v528
        %v530 = vlaneseq
        %v531 = vshrl.u32 %v530, 7
        %v532 = vsub.s32 2, %v531
        %v533 = vrot.slane %v520, %v532
        %v534 = vlaneseq
        %v535 = vshrl.u32 %v534, 7
        %v536 = vsub.s32 3, %v535
        %v537 = vrot.slane %v520, %v536
        %v558 = vunpack.c.l.b16 %v472
        %v559 = vunpack.c.l.b16 %v473
        %v560 = vunpack.c.l.b16 %v474
        %v561 = vunpack.c.l.b16 %v475
        %v562 = vunpack.c.l.b16 %v476
        %v563 = vunpack.c.l.b16 %v477
        %v564 = vunpack.c.l.b16 %v478
        %v565 = vunpack.c.l.b16 %v479
        %v566 = vunpack.c.l.b16 %v480
        %v567 = vunpack.c.l.b16 %v481
        %v568 = vunpack.c.l.b16 %v482
        %v569 = vunpack.c.l.b16 %v483
        %v570 = vunpack.c.l.b16 %v484
        %v571 = vunpack.c.l.b16 %v485
        %v572 = vunpack.c.l.b16 %v486
        %v573 = vunpack.c.l.b16 %v487
        %v574 = vpack.c.b16 %v559, %v558
        %v575 = vpack.c.b16 %v561, %v560
        %v576 = vpack.c.b16 %v563, %v562
        %v577 = vpack.c.b16 %v565, %v564
        %v578 = vpack.c.b16 %v567, %v566
        %v579 = vpack.c.b16 %v569, %v568
        %v580 = vpack.c.b16 %v571, %v570
        %v581 = vpack.c.b16 %v573, %v572
        %v622 = vunpack.c.l.b16 %v488
        %v623 = vunpack.c.h.b16 %v488
        %v624 = vunpack.c.l.b16 %v489
        %v625 = vunpack.c.h.b16 %v489
        %v626 = vunpack.c.l.b16 %v490
        %v627 = vunpack.c.h.b16 %v490
        %v628 = vunpack.c.l.b16 %v491
        %v629 = vunpack.c.h.b16 %v491
        %v630 = vunpack.c.l.b16 %v492
        %v631 = vunpack.c.h.b16 %v492
        %v632 = vunpack.c.l.b16 %v493
        %v633 = vunpack.c.h.b16 %v493
        %v634 = vunpack.c.l.b16 %v494
        %v635 = vunpack.c.h.b16 %v494
        %v636 = vunpack.c.l.b16 %v495
        %v637 = vunpack.c.h.b16 %v495
        %v638 = vunpack.c.l.b16 %v496
        %v639 = vunpack.c.h.b16 %v496
        %v640 = vunpack.c.l.b16 %v497
        %v641 = vunpack.c.h.b16 %v497
        %v642 = vunpack.c.l.b16 %v498
        %v643 = vunpack.c.h.b16 %v498
        %v644 = vunpack.c.l.b16 %v499
        %v645 = vunpack.c.h.b16 %v499
        %v646 = vunpack.c.l.b16 %v500
        %v647 = vunpack.c.h.b16 %v500
        %v648 = vunpack.c.l.b16 %v501
        %v649 = vunpack.c.h.b16 %v501
        %v650 = vunpack.c.l.b16 %v502
        %v651 = vunpack.c.h.b16 %v502
        %v652 = vunpack.c.l.b16 %v503
        %v653 = vunpack.c.h.b16 %v503
        %v654 = vunpack.c.l.b16 %v504
        %v655 = vunpack.c.h.b16 %v504
        %v656 = vunpack.c.l.b16 %v505
        %v657 = vunpack.c.h.b16 %v505
        %v658 = vunpack.c.l.b16 %v506
        %v659 = vunpack.c.h.b16 %v506
        %v660 = vunpack.c.l.b16 %v507
        %v661 = vunpack.c.h.b16 %v507
        %v662 = vunpack.c.l.b16 %v508
        %v663 = vunpack.c.h.b16 %v508
        %v664 = vunpack.c.l.b16 %v509
        %v665 = vunpack.c.h.b16 %v509
        %v666 = vunpack.c.l.b16 %v510
        %v667 = vunpack.c.h.b16 %v510
        %v668 = vunpack.c.l.b16 %v511
        %v669 = vunpack.c.h.b16 %v511
        %v670 = vunpack.c.l.b16 %v512
        %v671 = vunpack.c.h.b16 %v512
        %v672 = vunpack.c.l.b16 %v513
        %v673 = vunpack.c.h.b16 %v513
        %v674 = vunpack.c.l.b16 %v514
        %v675 = vunpack.c.h.b16 %v514
        %v676 = vunpack.c.l.b16 %v515
        %v677 = vunpack.c.h.b16 %v515
        %v678 = vunpack.c.l.b16 %v516
        %v679 = vunpack.c.h.b16 %v516
        %v680 = vunpack.c.l.b16 %v517
        %v681 = vunpack.c.h.b16 %v517
        %v682 = vunpack.c.l.b16 %v518
        %v683 = vunpack.c.h.b16 %v518
        %v684 = vunpack.c.l.b16 %v519
        %v685 = vunpack.c.h.b16 %v519
        %v686 = vpack.c.b16 %v626, %v622
        %v687 = vpack.c.b16 %v627, %v623
        %v688 = vpack.c.b16 %v628, %v624
        %v689 = vpack.c.b16 %v629, %v625
        %v690 = vpack.c.b16 %v634, %v630
        %v691 = vpack.c.b16 %v635, %v631
        %v692 = vpack.c.b16 %v636, %v632
        %v693 = vpack.c.b16 %v637, %v633
        %v694 = vpack.c.b16 %v642, %v638
        %v695 = vpack.c.b16 %v643, %v639
        %v696 = vpack.c.b16 %v644, %v640
        %v697 = vpack.c.b16 %v645, %v641
        %v698 = vpack.c.b16 %v650, %v646
        %v699 = vpack.c.b16 %v651, %v647
        %v700 = vpack.c.b16 %v652, %v648
        %v701 = vpack.c.b16 %v653, %v649
        %v702 = vpack.c.b16 %v658, %v654
        %v703 = vpack.c.b16 %v659, %v655
        %v704 = vpack.c.b16 %v660, %v656
        %v705 = vpack.c.b16 %v661, %v657
        %v706 = vpack.c.b16 %v666, %v662
        %v707 = vpack.c.b16 %v667, %v663
        %v708 = vpack.c.b16 %v668, %v664
        %v709 = vpack.c.b16 %v669, %v665
        %v710 = vpack.c.b16 %v674, %v670
        %v711 = vpack.c.b16 %v675, %v671
        %v712 = vpack.c.b16 %v676, %v672
        %v713 = vpack.c.b16 %v677, %v673
        %v714 = vpack.c.b16 %v682, %v678
        %v715 = vpack.c.b16 %v683, %v679
        %v716 = vpack.c.b16 %v684, %v680
        %v717 = vpack.c.b16 %v685, %v681
        %750 = vmatprep.subr.bf16.mxu0 %v715
        %751 = vmatpush1.bf16.msra.mxu0 %v714
        %752 = vmatprep.subr.bf16.mxu0 %v711
        %753 = vmatpush1.bf16.msra.mxu0 %v710
        %754 = vmatprep.subr.bf16.mxu0 %v707
        %755 = vmatpush1.bf16.msra.mxu0 %v706
        %756 = vmatprep.subr.bf16.mxu0 %v703
        %757 = vmatpush1.bf16.msra.mxu0 %v702
        %758 = vmatprep.subr.bf16.mxu0 %v699
        %759 = vmatpush1.bf16.msra.mxu0 %v698
        %760 = vmatprep.subr.bf16.mxu0 %v695
        %761 = vmatpush1.bf16.msra.mxu0 %v694
        %762 = vmatprep.subr.bf16.mxu0 %v691
        %763 = vmatpush1.bf16.msra.mxu0 %v690
        %764 = vmatprep.subr.bf16.mxu0 %v687
        %765 = vmatpush1.bf16.msra.mxu0 %v686
        %766 = vmatprep.subr.bf16.mxu0 0
        %767 = vmatpush2.bf16.msra.mxu0 0
        %768 = vmatprep.subr.bf16.mxu0 0
        %769 = vmatpush2.bf16.msra.mxu0 0
        %770 = vmatprep.subr.bf16.mxu0 0
        %771 = vmatpush2.bf16.msra.mxu0 0
        %772 = vmatprep.subr.bf16.mxu0 0
        %773 = vmatpush2.bf16.msra.mxu0 0
        %774 = vmatprep.subr.bf16.mxu0 0
        %775 = vmatpush2.bf16.msra.mxu0 0
        %776 = vmatprep.subr.bf16.mxu0 0
        %777 = vmatpush2.bf16.msra.mxu0 0
        %778 = vmatprep.subr.bf16.mxu0 0
        %779 = vmatpush2.bf16.msra.mxu0 0
        %780 = vmatprep.subr.bf16.mxu0 0
        %781 = vmatpush2.bf16.msra.mxu0 0
        %782 = vmatprep.mubr.bf16.mxu0 0
        %783 = vmatmul.mubr.bf16.gmra.mxu0 %v574
        %v784 = vpop.f32.mrf.mxu0
        %v785 = vadd.f32 %v525, %v784
        %v786 = vpop.f32.mrf.mxu0
        %v787 = vadd.f32 %v529, %v786
        %v788 = vpop.f32.mrf.mxu0
        %v789 = vadd.f32 %v525, %v788
        %v790 = vpop.f32.mrf.mxu0
        %v791 = vadd.f32 %v529, %v790
        %792 = vmatprep.mubr.bf16.mxu0 0
        %793 = vmatmul.mubr.bf16.gmra.mxu0 %v575
        %v794 = vpop.f32.mrf.mxu0
        %v795 = vadd.f32 %v525, %v794
        %v796 = vpop.f32.mrf.mxu0
        %v797 = vadd.f32 %v529, %v796
        %v798 = vpop.f32.mrf.mxu0
        %v799 = vadd.f32 %v525, %v798
        %v800 = vpop.f32.mrf.mxu0
        %v801 = vadd.f32 %v529, %v800
        %802 = vmatprep.mubr.bf16.mxu0 0
        %803 = vmatmul.mubr.bf16.gmra.mxu0 %v576
        %v804 = vpop.f32.mrf.mxu0
        %v805 = vadd.f32 %v525, %v804
        %v806 = vpop.f32.mrf.mxu0
        %v807 = vadd.f32 %v529, %v806
        %v808 = vpop.f32.mrf.mxu0
        %v809 = vadd.f32 %v525, %v808
        %v810 = vpop.f32.mrf.mxu0
        %v811 = vadd.f32 %v529, %v810
        %812 = vmatprep.mubr.bf16.mxu0 0
        %813 = vmatmul.mubr.bf16.gmra.mxu0 %v577
        %v814 = vpop.f32.mrf.mxu0
        %v815 = vadd.f32 %v525, %v814
        %v816 = vpop.f32.mrf.mxu0
        %v817 = vadd.f32 %v529, %v816
        %v818 = vpop.f32.mrf.mxu0
        %v819 = vadd.f32 %v525, %v818
        %v820 = vpop.f32.mrf.mxu0
        %v821 = vadd.f32 %v529, %v820
        %822 = vmatprep.mubr.bf16.mxu0 0
        %823 = vmatmul.mubr.bf16.gmra.mxu0 %v578
        %v824 = vpop.f32.mrf.mxu0
        %v825 = vadd.f32 %v525, %v824
        %v826 = vpop.f32.mrf.mxu0
        %v827 = vadd.f32 %v529, %v826
        %v828 = vpop.f32.mrf.mxu0
        %v829 = vadd.f32 %v525, %v828
        %v830 = vpop.f32.mrf.mxu0
        %v831 = vadd.f32 %v529, %v830
        %832 = vmatprep.mubr.bf16.mxu0 0
        %833 = vmatmul.mubr.bf16.gmra.mxu0 %v579
        %v834 = vpop.f32.mrf.mxu0
        %v835 = vadd.f32 %v525, %v834
        %v836 = vpop.f32.mrf.mxu0
        %v837 = vadd.f32 %v529, %v836
        %v838 = vpop.f32.mrf.mxu0
        %v839 = vadd.f32 %v525, %v838
        %v840 = vpop.f32.mrf.mxu0
        %v841 = vadd.f32 %v529, %v840
        %842 = vmatprep.mubr.bf16.mxu0 0
        %843 = vmatmul.mubr.bf16.gmra.mxu0 %v580
        %v844 = vpop.f32.mrf.mxu0
        %v845 = vadd.f32 %v525, %v844
        %v846 = vpop.f32.mrf.mxu0
        %v847 = vadd.f32 %v529, %v846
        %v848 = vpop.f32.mrf.mxu0
        %v849 = vadd.f32 %v525, %v848
        %v850 = vpop.f32.mrf.mxu0
        %v851 = vadd.f32 %v529, %v850
        %852 = vmatprep.mubr.bf16.mxu0 0
        %853 = vmatmul.mubr.bf16.gmra.mxu0 %v581
        %v854 = vpop.f32.mrf.mxu0
        %v855 = vadd.f32 %v525, %v854
        %v856 = vpop.f32.mrf.mxu0
        %v857 = vadd.f32 %v529, %v856
        %v858 = vpop.f32.mrf.mxu0
        %v859 = vadd.f32 %v525, %v858
        %v860 = vpop.f32.mrf.mxu0
        %v861 = vadd.f32 %v529, %v860
        %862 = vdwg.mxu0
        %863 = vmatprep.subr.bf16.mxu0 %v717
        %864 = vmatpush1.bf16.msra.mxu0 %v716
        %865 = vmatprep.subr.bf16.mxu0 %v713
        %866 = vmatpush1.bf16.msra.mxu0 %v712
        %867 = vmatprep.subr.bf16.mxu0 %v709
        %868 = vmatpush1.bf16.msra.mxu0 %v708
        %869 = vmatprep.subr.bf16.mxu0 %v705
        %870 = vmatpush1.bf16.msra.mxu0 %v704
        %871 = vmatprep.subr.bf16.mxu0 %v701
        %872 = vmatpush1.bf16.msra.mxu0 %v700
        %873 = vmatprep.subr.bf16.mxu0 %v697
        %874 = vmatpush1.bf16.msra.mxu0 %v696
        %875 = vmatprep.subr.bf16.mxu0 %v693
        %876 = vmatpush1.bf16.msra.mxu0 %v692
        %877 = vmatprep.subr.bf16.mxu0 %v689
        %878 = vmatpush1.bf16.msra.mxu0 %v688
        %879 = vmatprep.subr.bf16.mxu0 0
        %880 = vmatpush2.bf16.msra.mxu0 0
        %881 = vmatprep.subr.bf16.mxu0 0
        %882 = vmatpush2.bf16.msra.mxu0 0
        %883 = vmatprep.subr.bf16.mxu0 0
        %884 = vmatpush2.bf16.msra.mxu0 0
        %885 = vmatprep.subr.bf16.mxu0 0
        %886 = vmatpush2.bf16.msra.mxu0 0
        %887 = vmatprep.subr.bf16.mxu0 0
        %888 = vmatpush2.bf16.msra.mxu0 0
        %889 = vmatprep.subr.bf16.mxu0 0
        %890 = vmatpush2.bf16.msra.mxu0 0
        %891 = vmatprep.subr.bf16.mxu0 0
        %892 = vmatpush2.bf16.msra.mxu0 0
        %893 = vmatprep.subr.bf16.mxu0 0
        %894 = vmatpush2.bf16.msra.mxu0 0
        %895 = vmatprep.mubr.bf16.mxu0 0
        %896 = vmatmul.mubr.bf16.gmra.mxu0 %v574
        %v897 = vpop.f32.mrf.mxu0
        %v898 = vadd.f32 %v533, %v897
        %v899 = vpop.f32.mrf.mxu0
        %v900 = vadd.f32 %v537, %v899
        %v901 = vpop.f32.mrf.mxu0
        %v902 = vadd.f32 %v533, %v901
        %v903 = vpop.f32.mrf.mxu0
        %v904 = vadd.f32 %v537, %v903
        %905 = vmatprep.mubr.bf16.mxu0 0
        %906 = vmatmul.mubr.bf16.gmra.mxu0 %v575
        %v907 = vpop.f32.mrf.mxu0
        %v908 = vadd.f32 %v533, %v907
        %v909 = vpop.f32.mrf.mxu0
        %v910 = vadd.f32 %v537, %v909
        %v911 = vpop.f32.mrf.mxu0
        %v912 = vadd.f32 %v533, %v911
        %v913 = vpop.f32.mrf.mxu0
        %v914 = vadd.f32 %v537, %v913
        %915 = vmatprep.mubr.bf16.mxu0 0
        %916 = vmatmul.mubr.bf16.gmra.mxu0 %v576
        %v917 = vpop.f32.mrf.mxu0
        %v918 = vadd.f32 %v533, %v917
        %v919 = vpop.f32.mrf.mxu0
        %v920 = vadd.f32 %v537, %v919
        %v921 = vpop.f32.mrf.mxu0
        %v922 = vadd.f32 %v533, %v921
        %v923 = vpop.f32.mrf.mxu0
        %v924 = vadd.f32 %v537, %v923
        %925 = vmatprep.mubr.bf16.mxu0 0
        %926 = vmatmul.mubr.bf16.gmra.mxu0 %v577
        %v927 = vpop.f32.mrf.mxu0
        %v928 = vadd.f32 %v533, %v927
        %v929 = vpop.f32.mrf.mxu0
        %v930 = vadd.f32 %v537, %v929
        %v931 = vpop.f32.mrf.mxu0
        %v932 = vadd.f32 %v533, %v931
        %v933 = vpop.f32.mrf.mxu0
        %v934 = vadd.f32 %v537, %v933
        %935 = vmatprep.mubr.bf16.mxu0 0
        %936 = vmatmul.mubr.bf16.gmra.mxu0 %v578
        %v937 = vpop.f32.mrf.mxu0
        %v938 = vadd.f32 %v533, %v937
        %v939 = vpop.f32.mrf.mxu0
        %v940 = vadd.f32 %v537, %v939
        %v941 = vpop.f32.mrf.mxu0
        %v942 = vadd.f32 %v533, %v941
        %v943 = vpop.f32.mrf.mxu0
        %v944 = vadd.f32 %v537, %v943
        %945 = vmatprep.mubr.bf16.mxu0 0
        %946 = vmatmul.mubr.bf16.gmra.mxu0 %v579
        %v947 = vpop.f32.mrf.mxu0
        %v948 = vadd.f32 %v533, %v947
        %v949 = vpop.f32.mrf.mxu0
        %v950 = vadd.f32 %v537, %v949
        %v951 = vpop.f32.mrf.mxu0
        %v952 = vadd.f32 %v533, %v951
        %v953 = vpop.f32.mrf.mxu0
        %v954 = vadd.f32 %v537, %v953
        %955 = vmatprep.mubr.bf16.mxu0 0
        %956 = vmatmul.mubr.bf16.gmra.mxu0 %v580
        %v957 = vpop.f32.mrf.mxu0
        %v958 = vadd.f32 %v533, %v957
        %v959 = vpop.f32.mrf.mxu0
        %v960 = vadd.f32 %v537, %v959
        %v961 = vpop.f32.mrf.mxu0
        %v962 = vadd.f32 %v533, %v961
        %v963 = vpop.f32.mrf.mxu0
        %v964 = vadd.f32 %v537, %v963
        %965 = vmatprep.mubr.bf16.mxu0 0
        %966 = vmatmul.mubr.bf16.gmra.mxu0 %v581
        %v967 = vpop.f32.mrf.mxu0
        %v968 = vadd.f32 %v533, %v967
        %v969 = vpop.f32.mrf.mxu0
        %v970 = vadd.f32 %v537, %v969
        %v971 = vpop.f32.mrf.mxu0
        %v972 = vadd.f32 %v533, %v971
        %v973 = vpop.f32.mrf.mxu0
        %v974 = vadd.f32 %v537, %v973
        %975 = vdwg.mxu0
        %v976 = vmax.f32 %v785, 0.0
        %v977 = vmax.f32 %v787, 0.0
        %v978 = vmax.f32 %v898, 0.0
        %v979 = vmax.f32 %v900, 0.0
        %v980 = vmax.f32 %v789, 0.0
        %v981 = vmax.f32 %v791, 0.0
        %v982 = vmax.f32 %v902, 0.0
        %v983 = vmax.f32 %v904, 0.0
        %v984 = vmax.f32 %v795, 0.0
        %v985 = vmax.f32 %v797, 0.0
        %v986 = vmax.f32 %v908, 0.0
        %v987 = vmax.f32 %v910, 0.0
        %v988 = vmax.f32 %v799, 0.0
        %v989 = vmax.f32 %v801, 0.0
        %v990 = vmax.f32 %v912, 0.0
        %v991 = vmax.f32 %v914, 0.0
        %v992 = vmax.f32 %v805, 0.0
        %v993 = vmax.f32 %v807, 0.0
        %v994 = vmax.f32 %v918, 0.0
        %v995 = vmax.f32 %v920, 0.0
        %v996 = vmax.f32 %v809, 0.0
        %v997 = vmax.f32 %v811, 0.0
        %v998 = vmax.f32 %v922, 0.0
        %v999 = vmax.f32 %v924, 0.0
        %v1000 = vmax.f32 %v815, 0.0
        %v1001 = vmax.f32 %v817, 0.0
        %v1002 = vmax.f32 %v928, 0.0
        %v1003 = vmax.f32 %v930, 0.0
        %v1004 = vmax.f32 %v819, 0.0
        %v1005 = vmax.f32 %v821, 0.0
        %v1006 = vmax.f32 %v932, 0.0
        %v1007 = vmax.f32 %v934, 0.0
        %v1008 = vmax.f32 %v825, 0.0
        %v1009 = vmax.f32 %v827, 0.0
        %v1010 = vmax.f32 %v938, 0.0
        %v1011 = vmax.f32 %v940, 0.0
        %v1012 = vmax.f32 %v829, 0.0
        %v1013 = vmax.f32 %v831, 0.0
        %v1014 = vmax.f32 %v942, 0.0
        %v1015 = vmax.f32 %v944, 0.0
        %v1016 = vmax.f32 %v835, 0.0
        %v1017 = vmax.f32 %v837, 0.0
        %v1018 = vmax.f32 %v948, 0.0
        %v1019 = vmax.f32 %v950, 0.0
        %v1020 = vmax.f32 %v839, 0.0
        %v1021 = vmax.f32 %v841, 0.0
        %v1022 = vmax.f32 %v952, 0.0
        %v1023 = vmax.f32 %v954, 0.0
        %v1024 = vmax.f32 %v845, 0.0
        %v1025 = vmax.f32 %v847, 0.0
        %v1026 = vmax.f32 %v958, 0.0
        %v1027 = vmax.f32 %v960, 0.0
        %v1028 = vmax.f32 %v849, 0.0
        %v1029 = vmax.f32 %v851, 0.0
        %v1030 = vmax.f32 %v962, 0.0
        %v1031 = vmax.f32 %v964, 0.0
        %v1032 = vmax.f32 %v855, 0.0
        %v1033 = vmax.f32 %v857, 0.0
        %v1034 = vmax.f32 %v968, 0.0
        %v1035 = vmax.f32 %v970, 0.0
        %v1036 = vmax.f32 %v859, 0.0
        %v1037 = vmax.f32 %v861, 0.0
        %v1038 = vmax.f32 %v972, 0.0
        %v1039 = vmax.f32 %v974, 0.0
        %v1040 = vld [vmem:[#allocation2] sm:$0xff]
        %v1041 = vld [vmem:[#allocation2 + $0x8] sm:$0xff]
        %v1042 = vld [vmem:[#allocation2 + $0x10] sm:$0xff]
        %v1043 = vld [vmem:[#allocation2 + $0x18] sm:$0xff]
        %v1044 = vld [vmem:[#allocation2 + $0x20] sm:$0xff]
        %v1045 = vld [vmem:[#allocation2 + $0x28] sm:$0xff]
        %v1046 = vld [vmem:[#allocation2 + $0x30] sm:$0xff]
        %v1047 = vld [vmem:[#allocation2 + $0x38] sm:$0xff]
        %v1048 = vld [vmem:[#allocation2 + $0x40] sm:$0xff]
        %v1049 = vld [vmem:[#allocation2 + $0x48] sm:$0xff]
        %v1050 = vld [vmem:[#allocation2 + $0x50] sm:$0xff]
        %v1051 = vld [vmem:[#allocation2 + $0x58] sm:$0xff]
        %v1052 = vld [vmem:[#allocation2 + $0x60] sm:$0xff]
        %v1053 = vld [vmem:[#allocation2 + $0x68] sm:$0xff]
        %v1054 = vld [vmem:[#allocation2 + $0x70] sm:$0xff]
        %v1055 = vld [vmem:[#allocation2 + $0x78] sm:$0xff]
        %v1056 = vpack.c.bf16 %v980, %v976
        %v1057 = vpack.c.bf16 %v981, %v977
        %v1058 = vpack.c.bf16 %v982, %v978
        %v1059 = vpack.c.bf16 %v983, %v979
        %v1060 = vpack.c.bf16 %v988, %v984
        %v1061 = vpack.c.bf16 %v989, %v985
        %v1062 = vpack.c.bf16 %v990, %v986
        %v1063 = vpack.c.bf16 %v991, %v987
        %v1064 = vpack.c.bf16 %v996, %v992
        %v1065 = vpack.c.bf16 %v997, %v993
        %v1066 = vpack.c.bf16 %v998, %v994
        %v1067 = vpack.c.bf16 %v999, %v995
        %v1068 = vpack.c.bf16 %v1004, %v1000
        %v1069 = vpack.c.bf16 %v1005, %v1001
        %v1070 = vpack.c.bf16 %v1006, %v1002
        %v1071 = vpack.c.bf16 %v1007, %v1003
        %v1072 = vpack.c.bf16 %v1012, %v1008
        %v1073 = vpack.c.bf16 %v1013, %v1009
        %v1074 = vpack.c.bf16 %v1014, %v1010
        %v1075 = vpack.c.bf16 %v1015, %v1011
        %v1076 = vpack.c.bf16 %v1020, %v1016
        %v1077 = vpack.c.bf16 %v1021, %v1017
        %v1078 = vpack.c.bf16 %v1022, %v1018
        %v1079 = vpack.c.bf16 %v1023, %v1019
        %v1080 = vpack.c.bf16 %v1028, %v1024
        %v1081 = vpack.c.bf16 %v1029, %v1025
        %v1082 = vpack.c.bf16 %v1030, %v1026
        %v1083 = vpack.c.bf16 %v1031, %v1027
        %v1084 = vpack.c.bf16 %v1036, %v1032
        %v1085 = vpack.c.bf16 %v1037, %v1033
        %v1086 = vpack.c.bf16 %v1038, %v1034
        %v1087 = vpack.c.bf16 %v1039, %v1035
        %v1088 = vld [vmem:[%s352] sm:$0xf]
        %v1089 = vld [vmem:[%s352 + $0x4] sm:$0xf]
        %v1090 = vld [vmem:[%s352 + $0x8] sm:$0xf]
        %v1091 = vld [vmem:[%s352 + $0xc] sm:$0xf]
        %v1092 = vld [vmem:[%s352 + $0x10] sm:$0xf]
        %v1093 = vld [vmem:[%s352 + $0x14] sm:$0xf]
        %v1094 = vld [vmem:[%s352 + $0x18] sm:$0xf]
        %v1095 = vld [vmem:[%s352 + $0x1c] sm:$0xf]
        %v1096 = vld [vmem:[%s352 + $0x20] sm:$0xf]
        %v1097 = vld [vmem:[%s352 + $0x24] sm:$0xf]
        %v1098 = vld [vmem:[%s352 + $0x28] sm:$0xf]
        %v1099 = vld [vmem:[%s352 + $0x2c] sm:$0xf]
        %v1100 = vld [vmem:[%s352 + $0x30] sm:$0xf]
        %v1101 = vld [vmem:[%s352 + $0x34] sm:$0xf]
        %v1102 = vld [vmem:[%s352 + $0x38] sm:$0xf]
        %v1103 = vld [vmem:[%s352 + $0x3c] sm:$0xf]
        %v1104 = vld [vmem:[%s352 + $0x40] sm:$0xf]
        %v1105 = vld [vmem:[%s352 + $0x44] sm:$0xf]
        %v1106 = vld [vmem:[%s352 + $0x48] sm:$0xf]
        %v1107 = vld [vmem:[%s352 + $0x4c] sm:$0xf]
        %v1108 = vld [vmem:[%s352 + $0x50] sm:$0xf]
        %v1109 = vld [vmem:[%s352 + $0x54] sm:$0xf]
        %v1110 = vld [vmem:[%s352 + $0x58] sm:$0xf]
        %v1111 = vld [vmem:[%s352 + $0x5c] sm:$0xf]
        %v1112 = vld [vmem:[%s352 + $0x60] sm:$0xf]
        %v1113 = vld [vmem:[%s352 + $0x64] sm:$0xf]
        %v1114 = vld [vmem:[%s352 + $0x68] sm:$0xf]
        %v1115 = vld [vmem:[%s352 + $0x6c] sm:$0xf]
        %v1116 = vld [vmem:[%s352 + $0x70] sm:$0xf]
        %v1117 = vld [vmem:[%s352 + $0x74] sm:$0xf]
        %v1118 = vld [vmem:[%s352 + $0x78] sm:$0xf]
        %v1119 = vld [vmem:[%s352 + $0x7c] sm:$0xf]
        %v1120 = vld [vmem:[%s352 + $0x80] sm:$0xf]
        %v1121 = vld [vmem:[%s352 + $0x84] sm:$0xf]
        %v1122 = vld [vmem:[%s352 + $0x88] sm:$0xf]
        %v1123 = vld [vmem:[%s352 + $0x8c] sm:$0xf]
        %v1124 = vld [vmem:[%s352 + $0x90] sm:$0xf]
        %v1125 = vld [vmem:[%s352 + $0x94] sm:$0xf]
        %v1126 = vld [vmem:[%s352 + $0x98] sm:$0xf]
        %v1127 = vld [vmem:[%s352 + $0x9c] sm:$0xf]
        %v1128 = vld [vmem:[%s352 + $0xa0] sm:$0xf]
        %v1129 = vld [vmem:[%s352 + $0xa4] sm:$0xf]
        %v1130 = vld [vmem:[%s352 + $0xa8] sm:$0xf]
        %v1131 = vld [vmem:[%s352 + $0xac] sm:$0xf]
        %v1132 = vld [vmem:[%s352 + $0xb0] sm:$0xf]
        %v1133 = vld [vmem:[%s352 + $0xb4] sm:$0xf]
        %v1134 = vld [vmem:[%s352 + $0xb8] sm:$0xf]
        %v1135 = vld [vmem:[%s352 + $0xbc] sm:$0xf]
        %v1136 = vld [vmem:[%s352 + $0xc0] sm:$0xf]
        %v1137 = vld [vmem:[%s352 + $0xc4] sm:$0xf]
        %v1138 = vld [vmem:[%s352 + $0xc8] sm:$0xf]
        %v1139 = vld [vmem:[%s352 + $0xcc] sm:$0xf]
        %v1140 = vld [vmem:[%s352 + $0xd0] sm:$0xf]
        %v1141 = vld [vmem:[%s352 + $0xd4] sm:$0xf]
        %v1142 = vld [vmem:[%s352 + $0xd8] sm:$0xf]
        %v1143 = vld [vmem:[%s352 + $0xdc] sm:$0xf]
        %v1144 = vld [vmem:[%s352 + $0xe0] sm:$0xf]
        %v1145 = vld [vmem:[%s352 + $0xe4] sm:$0xf]
        %v1146 = vld [vmem:[%s352 + $0xe8] sm:$0xf]
        %v1147 = vld [vmem:[%s352 + $0xec] sm:$0xf]
        %v1148 = vld [vmem:[%s352 + $0xf0] sm:$0xf]
        %v1149 = vld [vmem:[%s352 + $0xf4] sm:$0xf]
        %v1150 = vld [vmem:[%s352 + $0xf8] sm:$0xf]
        %v1151 = vld [vmem:[%s352 + $0xfc] sm:$0xf]
        %v1216 = vunpack.c.l.b16 %v1088
        %v1217 = vunpack.c.l.b16 %v1089
        %v1218 = vunpack.c.l.b16 %v1090
        %v1219 = vunpack.c.l.b16 %v1091
        %v1220 = vunpack.c.l.b16 %v1092
        %v1221 = vunpack.c.l.b16 %v1093
        %v1222 = vunpack.c.l.b16 %v1094
        %v1223 = vunpack.c.l.b16 %v1095
        %v1224 = vunpack.c.l.b16 %v1096
        %v1225 = vunpack.c.l.b16 %v1097
        %v1226 = vunpack.c.l.b16 %v1098
        %v1227 = vunpack.c.l.b16 %v1099
        %v1228 = vunpack.c.l.b16 %v1100
        %v1229 = vunpack.c.l.b16 %v1101
        %v1230 = vunpack.c.l.b16 %v1102
        %v1231 = vunpack.c.l.b16 %v1103
        %v1232 = vunpack.c.l.b16 %v1104
        %v1233 = vunpack.c.l.b16 %v1105
        %v1234 = vunpack.c.l.b16 %v1106
        %v1235 = vunpack.c.l.b16 %v1107
        %v1236 = vunpack.c.l.b16 %v1108
        %v1237 = vunpack.c.l.b16 %v1109
        %v1238 = vunpack.c.l.b16 %v1110
        %v1239 = vunpack.c.l.b16 %v1111
        %v1240 = vunpack.c.l.b16 %v1112
        %v1241 = vunpack.c.l.b16 %v1113
        %v1242 = vunpack.c.l.b16 %v1114
        %v1243 = vunpack.c.l.b16 %v1115
        %v1244 = vunpack.c.l.b16 %v1116
        %v1245 = vunpack.c.l.b16 %v1117
        %v1246 = vunpack.c.l.b16 %v1118
        %v1247 = vunpack.c.l.b16 %v1119
        %v1248 = vunpack.c.l.b16 %v1120
        %v1249 = vunpack.c.l.b16 %v1121
        %v1250 = vunpack.c.l.b16 %v1122
        %v1251 = vunpack.c.l.b16 %v1123
        %v1252 = vunpack.c.l.b16 %v1124
        %v1253 = vunpack.c.l.b16 %v1125
        %v1254 = vunpack.c.l.b16 %v1126
        %v1255 = vunpack.c.l.b16 %v1127
        %v1256 = vunpack.c.l.b16 %v1128
        %v1257 = vunpack.c.l.b16 %v1129
        %v1258 = vunpack.c.l.b16 %v1130
        %v1259 = vunpack.c.l.b16 %v1131
        %v1260 = vunpack.c.l.b16 %v1132
        %v1261 = vunpack.c.l.b16 %v1133
        %v1262 = vunpack.c.l.b16 %v1134
        %v1263 = vunpack.c.l.b16 %v1135
        %v1264 = vunpack.c.l.b16 %v1136
        %v1265 = vunpack.c.l.b16 %v1137
        %v1266 = vunpack.c.l.b16 %v1138
        %v1267 = vunpack.c.l.b16 %v1139
        %v1268 = vunpack.c.l.b16 %v1140
        %v1269 = vunpack.c.l.b16 %v1141
        %v1270 = vunpack.c.l.b16 %v1142
        %v1271 = vunpack.c.l.b16 %v1143
        %v1272 = vunpack.c.l.b16 %v1144
        %v1273 = vunpack.c.l.b16 %v1145
        %v1274 = vunpack.c.l.b16 %v1146
        %v1275 = vunpack.c.l.b16 %v1147
        %v1276 = vunpack.c.l.b16 %v1148
        %v1277 = vunpack.c.l.b16 %v1149
        %v1278 = vunpack.c.l.b16 %v1150
        %v1279 = vunpack.c.l.b16 %v1151
        %v1280 = vpack.c.b16 %v1217, %v1216
        %v1281 = vpack.c.b16 %v1219, %v1218
        %v1282 = vpack.c.b16 %v1221, %v1220
        %v1283 = vpack.c.b16 %v1223, %v1222
        %v1284 = vpack.c.b16 %v1225, %v1224
        %v1285 = vpack.c.b16 %v1227, %v1226
        %v1286 = vpack.c.b16 %v1229, %v1228
        %v1287 = vpack.c.b16 %v1231, %v1230
        %v1288 = vpack.c.b16 %v1233, %v1232
        %v1289 = vpack.c.b16 %v1235, %v1234
        %v1290 = vpack.c.b16 %v1237, %v1236
        %v1291 = vpack.c.b16 %v1239, %v1238
        %v1292 = vpack.c.b16 %v1241, %v1240
        %v1293 = vpack.c.b16 %v1243, %v1242
        %v1294 = vpack.c.b16 %v1245, %v1244
        %v1295 = vpack.c.b16 %v1247, %v1246
        %v1296 = vpack.c.b16 %v1249, %v1248
        %v1297 = vpack.c.b16 %v1251, %v1250
        %v1298 = vpack.c.b16 %v1253, %v1252
        %v1299 = vpack.c.b16 %v1255, %v1254
        %v1300 = vpack.c.b16 %v1257, %v1256
        %v1301 = vpack.c.b16 %v1259, %v1258
        %v1302 = vpack.c.b16 %v1261, %v1260
        %v1303 = vpack.c.b16 %v1263, %v1262
        %v1304 = vpack.c.b16 %v1265, %v1264
        %v1305 = vpack.c.b16 %v1267, %v1266
        %v1306 = vpack.c.b16 %v1269, %v1268
        %v1307 = vpack.c.b16 %v1271, %v1270
        %v1308 = vpack.c.b16 %v1273, %v1272
        %v1309 = vpack.c.b16 %v1275, %v1274
        %v1310 = vpack.c.b16 %v1277, %v1276
        %v1311 = vpack.c.b16 %v1279, %v1278
        %1344 = vmatprep.subr.bf16.mxu0 0
        %1345 = vmatpush1.bf16.msra.mxu0 %v1287
        %1346 = vmatprep.subr.bf16.mxu0 0
        %1347 = vmatpush1.bf16.msra.mxu0 %v1286
        %1348 = vmatprep.subr.bf16.mxu0 0
        %1349 = vmatpush1.bf16.msra.mxu0 %v1285
        %1350 = vmatprep.subr.bf16.mxu0 0
        %1351 = vmatpush1.bf16.msra.mxu0 %v1284
        %1352 = vmatprep.subr.bf16.mxu0 0
        %1353 = vmatpush1.bf16.msra.mxu0 %v1283
        %1354 = vmatprep.subr.bf16.mxu0 0
        %1355 = vmatpush1.bf16.msra.mxu0 %v1282
        %1356 = vmatprep.subr.bf16.mxu0 0
        %1357 = vmatpush1.bf16.msra.mxu0 %v1281
        %1358 = vmatprep.subr.bf16.mxu0 0
        %1359 = vmatpush1.bf16.msra.mxu0 %v1280
        %1360 = vmatprep.subr.bf16.mxu0 0
        %1361 = vmatpush2.bf16.msra.mxu0 %v1295
        %1362 = vmatprep.subr.bf16.mxu0 0
        %1363 = vmatpush2.bf16.msra.mxu0 %v1294
        %1364 = vmatprep.subr.bf16.mxu0 0
        %1365 = vmatpush2.bf16.msra.mxu0 %v1293
        %1366 = vmatprep.subr.bf16.mxu0 0
        %1367 = vmatpush2.bf16.msra.mxu0 %v1292
        %1368 = vmatprep.subr.bf16.mxu0 0
        %1369 = vmatpush2.bf16.msra.mxu0 %v1291
        %1370 = vmatprep.subr.bf16.mxu0 0
        %1371 = vmatpush2.bf16.msra.mxu0 %v1290
        %1372 = vmatprep.subr.bf16.mxu0 0
        %1373 = vmatpush2.bf16.msra.mxu0 %v1289
        %1374 = vmatprep.subr.bf16.mxu0 0
        %1375 = vmatpush2.bf16.msra.mxu0 %v1288
        %1376 = vmatprep.mubr.bf16.mxu0 %v1057
        %1377 = vmatmul.mubr.bf16.gmra.mxu0 %v1056
        %v1378 = vpop.f32.mrf.mxu0
        %v1379 = vadd.f32 0.0, %v1378
        %v1380 = vpop.f32.mrf.mxu0
        %v1381 = vpop.f32.mrf.mxu0
        %v1382 = vadd.f32 0.0, %v1381
        %v1383 = vpop.f32.mrf.mxu0
        %1384 = vmatprep.mubr.bf16.mxu0 %v1061
        %1385 = vmatmul.mubr.bf16.gmra.mxu0 %v1060
        %v1386 = vpop.f32.mrf.mxu0
        %v1387 = vadd.f32 0.0, %v1386
        %v1388 = vpop.f32.mrf.mxu0
        %v1389 = vpop.f32.mrf.mxu0
        %v1390 = vadd.f32 0.0, %v1389
        %v1391 = vpop.f32.mrf.mxu0
        %1392 = vmatprep.mubr.bf16.mxu0 %v1065
        %1393 = vmatmul.mubr.bf16.gmra.mxu0 %v1064
        %v1394 = vpop.f32.mrf.mxu0
        %v1395 = vadd.f32 0.0, %v1394
        %v1396 = vpop.f32.mrf.mxu0
        %v1397 = vpop.f32.mrf.mxu0
        %v1398 = vadd.f32 0.0, %v1397
        %v1399 = vpop.f32.mrf.mxu0
        %1400 = vmatprep.mubr.bf16.mxu0 %v1069
        %1401 = vmatmul.mubr.bf16.gmra.mxu0 %v1068
        %v1402 = vpop.f32.mrf.mxu0
        %v1403 = vadd.f32 0.0, %v1402
        %v1404 = vpop.f32.mrf.mxu0
        %v1405 = vpop.f32.mrf.mxu0
        %v1406 = vadd.f32 0.0, %v1405
        %v1407 = vpop.f32.mrf.mxu0
        %1408 = vmatprep.mubr.bf16.mxu0 %v1073
        %1409 = vmatmul.mubr.bf16.gmra.mxu0 %v1072
        %v1410 = vpop.f32.mrf.mxu0
        %v1411 = vadd.f32 0.0, %v1410
        %v1412 = vpop.f32.mrf.mxu0
        %v1413 = vpop.f32.mrf.mxu0
        %v1414 = vadd.f32 0.0, %v1413
        %v1415 = vpop.f32.mrf.mxu0
        %1416 = vmatprep.mubr.bf16.mxu0 %v1077
        %1417 = vmatmul.mubr.bf16.gmra.mxu0 %v1076
        %v1418 = vpop.f32.mrf.mxu0
        %v1419 = vadd.f32 0.0, %v1418
        %v1420 = vpop.f32.mrf.mxu0
        %v1421 = vpop.f32.mrf.mxu0
        %v1422 = vadd.f32 0.0, %v1421
        %v1423 = vpop.f32.mrf.mxu0
        %1424 = vmatprep.mubr.bf16.mxu0 %v1081
        %1425 = vmatmul.mubr.bf16.gmra.mxu0 %v1080
        %v1426 = vpop.f32.mrf.mxu0
        %v1427 = vadd.f32 0.0, %v1426
        %v1428 = vpop.f32.mrf.mxu0
        %v1429 = vpop.f32.mrf.mxu0
        %v1430 = vadd.f32 0.0, %v1429
        %v1431 = vpop.f32.mrf.mxu0
        %1432 = vmatprep.mubr.bf16.mxu0 %v1085
        %1433 = vmatmul.mubr.bf16.gmra.mxu0 %v1084
        %v1434 = vpop.f32.mrf.mxu0
        %v1435 = vadd.f32 0.0, %v1434
        %v1436 = vpop.f32.mrf.mxu0
        %v1437 = vpop.f32.mrf.mxu0
        %v1438 = vadd.f32 0.0, %v1437
        %v1439 = vpop.f32.mrf.mxu0
        %1440 = vdwg.mxu0
        %1441 = vmatprep.subr.bf16.mxu0 0
        %1442 = vmatpush1.bf16.msra.mxu0 %v1303
        %1443 = vmatprep.subr.bf16.mxu0 0
        %1444 = vmatpush1.bf16.msra.mxu0 %v1302
        %1445 = vmatprep.subr.bf16.mxu0 0
        %1446 = vmatpush1.bf16.msra.mxu0 %v1301
        %1447 = vmatprep.subr.bf16.mxu0 0
        %1448 = vmatpush1.bf16.msra.mxu0 %v1300
        %1449 = vmatprep.subr.bf16.mxu0 0
        %1450 = vmatpush1.bf16.msra.mxu0 %v1299
        %1451 = vmatprep.subr.bf16.mxu0 0
        %1452 = vmatpush1.bf16.msra.mxu0 %v1298
        %1453 = vmatprep.subr.bf16.mxu0 0
        %1454 = vmatpush1.bf16.msra.mxu0 %v1297
        %1455 = vmatprep.subr.bf16.mxu0 0
        %1456 = vmatpush1.bf16.msra.mxu0 %v1296
        %1457 = vmatprep.subr.bf16.mxu0 0
        %1458 = vmatpush2.bf16.msra.mxu0 %v1311
        %1459 = vmatprep.subr.bf16.mxu0 0
        %1460 = vmatpush2.bf16.msra.mxu0 %v1310
        %1461 = vmatprep.subr.bf16.mxu0 0
        %1462 = vmatpush2.bf16.msra.mxu0 %v1309
        %1463 = vmatprep.subr.bf16.mxu0 0
        %1464 = vmatpush2.bf16.msra.mxu0 %v1308
        %1465 = vmatprep.subr.bf16.mxu0 0
        %1466 = vmatpush2.bf16.msra.mxu0 %v1307
        %1467 = vmatprep.subr.bf16.mxu0 0
        %1468 = vmatpush2.bf16.msra.mxu0 %v1306
        %1469 = vmatprep.subr.bf16.mxu0 0
        %1470 = vmatpush2.bf16.msra.mxu0 %v1305
        %1471 = vmatprep.subr.bf16.mxu0 0
        %1472 = vmatpush2.bf16.msra.mxu0 %v1304
        %1473 = vmatprep.mubr.bf16.mxu0 %v1059
        %1474 = vmatmul.mubr.bf16.gmra.mxu0 %v1058
        %v1475 = vpop.f32.mrf.mxu0
        %v1476 = vadd.f32 %v1379, %v1475
        %v1477 = vpop.f32.mrf.mxu0
        %v1478 = vpop.f32.mrf.mxu0
        %v1479 = vadd.f32 %v1382, %v1478
        %v1480 = vpop.f32.mrf.mxu0
        %1481 = vmatprep.mubr.bf16.mxu0 %v1063
        %1482 = vmatmul.mubr.bf16.gmra.mxu0 %v1062
        %v1483 = vpop.f32.mrf.mxu0
        %v1484 = vadd.f32 %v1387, %v1483
        %v1485 = vpop.f32.mrf.mxu0
        %v1486 = vpop.f32.mrf.mxu0
        %v1487 = vadd.f32 %v1390, %v1486
        %v1488 = vpop.f32.mrf.mxu0
        %1489 = vmatprep.mubr.bf16.mxu0 %v1067
        %1490 = vmatmul.mubr.bf16.gmra.mxu0 %v1066
        %v1491 = vpop.f32.mrf.mxu0
        %v1492 = vadd.f32 %v1395, %v1491
        %v1493 = vpop.f32.mrf.mxu0
        %v1494 = vpop.f32.mrf.mxu0
        %v1495 = vadd.f32 %v1398, %v1494
        %v1496 = vpop.f32.mrf.mxu0
        %1497 = vmatprep.mubr.bf16.mxu0 %v1071
        %1498 = vmatmul.mubr.bf16.gmra.mxu0 %v1070
        %v1499 = vpop.f32.mrf.mxu0
        %v1500 = vadd.f32 %v1403, %v1499
        %v1501 = vpop.f32.mrf.mxu0
        %v1502 = vpop.f32.mrf.mxu0
        %v1503 = vadd.f32 %v1406, %v1502
        %v1504 = vpop.f32.mrf.mxu0
        %1505 = vmatprep.mubr.bf16.mxu0 %v1075
        %1506 = vmatmul.mubr.bf16.gmra.mxu0 %v1074
        %v1507 = vpop.f32.mrf.mxu0
        %v1508 = vadd.f32 %v1411, %v1507
        %v1509 = vpop.f32.mrf.mxu0
        %v1510 = vpop.f32.mrf.mxu0
        %v1511 = vadd.f32 %v1414, %v1510
        %v1512 = vpop.f32.mrf.mxu0
        %1513 = vmatprep.mubr.bf16.mxu0 %v1079
        %1514 = vmatmul.mubr.bf16.gmra.mxu0 %v1078
        %v1515 = vpop.f32.mrf.mxu0
        %v1516 = vadd.f32 %v1419, %v1515
        %v1517 = vpop.f32.mrf.mxu0
        %v1518 = vpop.f32.mrf.mxu0
        %v1519 = vadd.f32 %v1422, %v1518
        %v1520 = vpop.f32.mrf.mxu0
        %1521 = vmatprep.mubr.bf16.mxu0 %v1083
        %1522 = vmatmul.mubr.bf16.gmra.mxu0 %v1082
        %v1523 = vpop.f32.mrf.mxu0
        %v1524 = vadd.f32 %v1427, %v1523
        %v1525 = vpop.f32.mrf.mxu0
        %v1526 = vpop.f32.mrf.mxu0
        %v1527 = vadd.f32 %v1430, %v1526
        %v1528 = vpop.f32.mrf.mxu0
        %1529 = vmatprep.mubr.bf16.mxu0 %v1087
        %1530 = vmatmul.mubr.bf16.gmra.mxu0 %v1086
        %v1531 = vpop.f32.mrf.mxu0
        %v1532 = vadd.f32 %v1435, %v1531
        %v1533 = vpop.f32.mrf.mxu0
        %v1534 = vpop.f32.mrf.mxu0
        %v1535 = vadd.f32 %v1438, %v1534
        %v1536 = vpop.f32.mrf.mxu0
        %1537 = vdwg.mxu0
        %v1538 = vadd.f32 %v1040, %v1476
        %v1539 = vadd.f32 %v1041, %v1479
        %v1540 = vadd.f32 %v1042, %v1484
        %v1541 = vadd.f32 %v1043, %v1487
        %v1542 = vadd.f32 %v1044, %v1492
        %v1543 = vadd.f32 %v1045, %v1495
        %v1544 = vadd.f32 %v1046, %v1500
        %v1545 = vadd.f32 %v1047, %v1503
        %v1546 = vadd.f32 %v1048, %v1508
        %v1547 = vadd.f32 %v1049, %v1511
        %v1548 = vadd.f32 %v1050, %v1516
        %v1549 = vadd.f32 %v1051, %v1519
        %v1550 = vadd.f32 %v1052, %v1524
        %v1551 = vadd.f32 %v1053, %v1527
        %v1552 = vadd.f32 %v1054, %v1532
        %v1553 = vadd.f32 %v1055, %v1535
        %1554 = vst [vmem:[#allocation2] sm:$0xff] %v1538
        %1555 = vst [vmem:[#allocation2 + $0x8] sm:$0xff] %v1539
        %1556 = vst [vmem:[#allocation2 + $0x10] sm:$0xff] %v1540
        %1557 = vst [vmem:[#allocation2 + $0x18] sm:$0xff] %v1541
        %1558 = vst [vmem:[#allocation2 + $0x20] sm:$0xff] %v1542
        %1559 = vst [vmem:[#allocation2 + $0x28] sm:$0xff] %v1543
        %1560 = vst [vmem:[#allocation2 + $0x30] sm:$0xff] %v1544
        %1561 = vst [vmem:[#allocation2 + $0x38] sm:$0xff] %v1545
        %1562 = vst [vmem:[#allocation2 + $0x40] sm:$0xff] %v1546
        %1563 = vst [vmem:[#allocation2 + $0x48] sm:$0xff] %v1547
        %1564 = vst [vmem:[#allocation2 + $0x50] sm:$0xff] %v1548
        %1565 = vst [vmem:[#allocation2 + $0x58] sm:$0xff] %v1549
        %1566 = vst [vmem:[#allocation2 + $0x60] sm:$0xff] %v1550
        %1567 = vst [vmem:[#allocation2 + $0x68] sm:$0xff] %v1551
        %1568 = vst [vmem:[#allocation2 + $0x70] sm:$0xff] %v1552
        %1569 = vst [vmem:[#allocation2 + $0x78] sm:$0xff] %v1553
        // Predicated region
        $region53: #{_ffn_pallas.1} parent=47 // pred_check
          %p1570 = pneg %p356
        $region54: #{_ffn_pallas.1} parent=47 // pred_check_branch
          %1572 = sbr.rel (%p1570) target = $region56
        $region55: #{_ffn_pallas.1} parent=47 // pred_region
          %v1573 = vld [vmem:[%s335] sm:$0xff]
          %v1574 = vld [vmem:[%s335 + $0x8] sm:$0xff]
          %v1575 = vld [vmem:[%s335 + $0x10] sm:$0xff]
          %v1576 = vld [vmem:[%s335 + $0x18] sm:$0xff]
          %v1577 = vld [vmem:[%s335 + $0x20] sm:$0xff]
          %v1578 = vld [vmem:[%s335 + $0x28] sm:$0xff]
          %v1579 = vld [vmem:[%s335 + $0x30] sm:$0xff]
          %v1580 = vld [vmem:[%s335 + $0x38] sm:$0xff]
          %v1581 = vld [vmem:[%s335 + $0x40] sm:$0xff]
          %v1582 = vld [vmem:[%s335 + $0x48] sm:$0xff]
          %v1583 = vld [vmem:[%s335 + $0x50] sm:$0xff]
          %v1584 = vld [vmem:[%s335 + $0x58] sm:$0xff]
          %v1585 = vld [vmem:[%s335 + $0x60] sm:$0xff]
          %v1586 = vld [vmem:[%s335 + $0x68] sm:$0xff]
          %v1587 = vld [vmem:[%s335 + $0x70] sm:$0xff]
          %v1588 = vld [vmem:[%s335 + $0x78] sm:$0xff]
          %v1589 = vld [vmem:[#allocation2] sm:$0xff]
          %v1590 = vld [vmem:[#allocation2 + $0x8] sm:$0xff]
          %v1591 = vld [vmem:[#allocation2 + $0x10] sm:$0xff]
          %v1592 = vld [vmem:[#allocation2 + $0x18] sm:$0xff]
          %v1593 = vld [vmem:[#allocation2 + $0x20] sm:$0xff]
          %v1594 = vld [vmem:[#allocation2 + $0x28] sm:$0xff]
          %v1595 = vld [vmem:[#allocation2 + $0x30] sm:$0xff]
          %v1596 = vld [vmem:[#allocation2 + $0x38] sm:$0xff]
          %v1597 = vld [vmem:[#allocation2 + $0x40] sm:$0xff]
          %v1598 = vld [vmem:[#allocation2 + $0x48] sm:$0xff]
          %v1599 = vld [vmem:[#allocation2 + $0x50] sm:$0xff]
          %v1600 = vld [vmem:[#allocation2 + $0x58] sm:$0xff]
          %v1601 = vld [vmem:[#allocation2 + $0x60] sm:$0xff]
          %v1602 = vld [vmem:[#allocation2 + $0x68] sm:$0xff]
          %v1603 = vld [vmem:[#allocation2 + $0x70] sm:$0xff]
          %v1604 = vld [vmem:[#allocation2 + $0x78] sm:$0xff]
          %v1605 = vadd.f32 %v1573, %v1589
          %v1606 = vadd.f32 %v1574, %v1590
          %v1607 = vadd.f32 %v1575, %v1591
          %v1608 = vadd.f32 %v1576, %v1592
          %v1609 = vadd.f32 %v1577, %v1593
          %v1610 = vadd.f32 %v1578, %v1594
          %v1611 = vadd.f32 %v1579, %v1595
          %v1612 = vadd.f32 %v1580, %v1596
          %v1613 = vadd.f32 %v1581, %v1597
          %v1614 = vadd.f32 %v1582, %v1598
          %v1615 = vadd.f32 %v1583, %v1599
          %v1616 = vadd.f32 %v1584, %v1600
          %v1617 = vadd.f32 %v1585, %v1601
          %v1618 = vadd.f32 %v1586, %v1602
          %v1619 = vadd.f32 %v1587, %v1603
          %v1620 = vadd.f32 %v1588, %v1604
          %v1621 = vld [vmem:[%s4] sm:$0x1]
          %v1623 = vlaneseq
          %v1624 = vshrl.u32 %v1623, 7
          %v1625 = vsub.s32 0, %v1624
          %v1626 = vrot.slane %v1621, %v1625
          %v1628 = vadd.f32 %v1605, %v1626
          %v1629 = vadd.f32 %v1606, %v1626
          %v1630 = vadd.f32 %v1607, %v1626
          %v1631 = vadd.f32 %v1608, %v1626
          %v1632 = vadd.f32 %v1609, %v1626
          %v1633 = vadd.f32 %v1610, %v1626
          %v1634 = vadd.f32 %v1611, %v1626
          %v1635 = vadd.f32 %v1612, %v1626
          %v1636 = vadd.f32 %v1613, %v1626
          %v1637 = vadd.f32 %v1614, %v1626
          %v1638 = vadd.f32 %v1615, %v1626
          %v1639 = vadd.f32 %v1616, %v1626
          %v1640 = vadd.f32 %v1617, %v1626
          %v1641 = vadd.f32 %v1618, %v1626
          %v1642 = vadd.f32 %v1619, %v1626
          %v1643 = vadd.f32 %v1620, %v1626
          %1644 = vadd.xlane.f32.xlu0 %v1628
          %v1645 = vpop.xlane.xlu0 %1644
          %1646 = vadd.xlane.f32.xlu0 %v1629
          %v1647 = vpop.xlane.xlu0 %1646
          %1648 = vadd.xlane.f32.xlu0 %v1630
          %v1649 = vpop.xlane.xlu0 %1648
          %1650 = vadd.xlane.f32.xlu0 %v1631
          %v1651 = vpop.xlane.xlu0 %1650
          %1652 = vadd.xlane.f32.xlu0 %v1632
          %v1653 = vpop.xlane.xlu0 %1652
          %1654 = vadd.xlane.f32.xlu0 %v1633
          %v1655 = vpop.xlane.xlu0 %1654
          %1656 = vadd.xlane.f32.xlu0 %v1634
          %v1657 = vpop.xlane.xlu0 %1656
          %1658 = vadd.xlane.f32.xlu0 %v1635
          %v1659 = vpop.xlane.xlu0 %1658
          %1660 = vadd.xlane.f32.xlu0 %v1636
          %v1661 = vpop.xlane.xlu0 %1660
          %1662 = vadd.xlane.f32.xlu0 %v1637
          %v1663 = vpop.xlane.xlu0 %1662
          %1664 = vadd.xlane.f32.xlu0 %v1638
          %v1665 = vpop.xlane.xlu0 %1664
          %1666 = vadd.xlane.f32.xlu0 %v1639
          %v1667 = vpop.xlane.xlu0 %1666
          %1668 = vadd.xlane.f32.xlu0 %v1640
          %v1669 = vpop.xlane.xlu0 %1668
          %1670 = vadd.xlane.f32.xlu0 %v1641
          %v1671 = vpop.xlane.xlu0 %1670
          %1672 = vadd.xlane.f32.xlu0 %v1642
          %v1673 = vpop.xlane.xlu0 %1672
          %1674 = vadd.xlane.f32.xlu0 %v1643
          %v1675 = vpop.xlane.xlu0 %1674
          %v1676 = vmul.f32 %v1628, %v1628
          %v1677 = vmul.f32 %v1629, %v1629
          %v1678 = vmul.f32 %v1630, %v1630
          %v1679 = vmul.f32 %v1631, %v1631
          %v1680 = vmul.f32 %v1632, %v1632
          %v1681 = vmul.f32 %v1633, %v1633
          %v1682 = vmul.f32 %v1634, %v1634
          %v1683 = vmul.f32 %v1635, %v1635
          %v1684 = vmul.f32 %v1636, %v1636
          %v1685 = vmul.f32 %v1637, %v1637
          %v1686 = vmul.f32 %v1638, %v1638
          %v1687 = vmul.f32 %v1639, %v1639
          %v1688 = vmul.f32 %v1640, %v1640
          %v1689 = vmul.f32 %v1641, %v1641
          %v1690 = vmul.f32 %v1642, %v1642
          %v1691 = vmul.f32 %v1643, %v1643
          %1692 = vadd.xlane.f32.xlu0 %v1676
          %v1693 = vpop.xlane.xlu0 %1692
          %1694 = vadd.xlane.f32.xlu0 %v1677
          %v1695 = vpop.xlane.xlu0 %1694
          %1696 = vadd.xlane.f32.xlu0 %v1678
          %v1697 = vpop.xlane.xlu0 %1696
          %1698 = vadd.xlane.f32.xlu0 %v1679
          %v1699 = vpop.xlane.xlu0 %1698
          %1700 = vadd.xlane.f32.xlu0 %v1680
          %v1701 = vpop.xlane.xlu0 %1700
          %1702 = vadd.xlane.f32.xlu0 %v1681
          %v1703 = vpop.xlane.xlu0 %1702
          %1704 = vadd.xlane.f32.xlu0 %v1682
          %v1705 = vpop.xlane.xlu0 %1704
          %1706 = vadd.xlane.f32.xlu0 %v1683
          %v1707 = vpop.xlane.xlu0 %1706
          %1708 = vadd.xlane.f32.xlu0 %v1684
          %v1709 = vpop.xlane.xlu0 %1708
          %1710 = vadd.xlane.f32.xlu0 %v1685
          %v1711 = vpop.xlane.xlu0 %1710
          %1712 = vadd.xlane.f32.xlu0 %v1686
          %v1713 = vpop.xlane.xlu0 %1712
          %1714 = vadd.xlane.f32.xlu0 %v1687
          %v1715 = vpop.xlane.xlu0 %1714
          %1716 = vadd.xlane.f32.xlu0 %v1688
          %v1717 = vpop.xlane.xlu0 %1716
          %1718 = vadd.xlane.f32.xlu0 %v1689
          %v1719 = vpop.xlane.xlu0 %1718
          %1720 = vadd.xlane.f32.xlu0 %v1690
          %v1721 = vpop.xlane.xlu0 %1720
          %1722 = vadd.xlane.f32.xlu0 %v1691
          %v1723 = vpop.xlane.xlu0 %1722
          %v1724 = vmul.f32 %v1645, 0.0078125
          %v1725 = vmul.f32 %v1647, 0.0078125
          %v1726 = vmul.f32 %v1649, 0.0078125
          %v1727 = vmul.f32 %v1651, 0.0078125
          %v1728 = vmul.f32 %v1653, 0.0078125
          %v1729 = vmul.f32 %v1655, 0.0078125
          %v1730 = vmul.f32 %v1657, 0.0078125
          %v1731 = vmul.f32 %v1659, 0.0078125
          %v1732 = vmul.f32 %v1661, 0.0078125
          %v1733 = vmul.f32 %v1663, 0.0078125
          %v1734 = vmul.f32 %v1665, 0.0078125
          %v1735 = vmul.f32 %v1667, 0.0078125
          %v1736 = vmul.f32 %v1669, 0.0078125
          %v1737 = vmul.f32 %v1671, 0.0078125
          %v1738 = vmul.f32 %v1673, 0.0078125
          %v1739 = vmul.f32 %v1675, 0.0078125
          %v1740 = vmul.f32 %v1693, 0.0078125
          %v1741 = vmul.f32 %v1695, 0.0078125
          %v1742 = vmul.f32 %v1697, 0.0078125
          %v1743 = vmul.f32 %v1699, 0.0078125
          %v1744 = vmul.f32 %v1701, 0.0078125
          %v1745 = vmul.f32 %v1703, 0.0078125
          %v1746 = vmul.f32 %v1705, 0.0078125
          %v1747 = vmul.f32 %v1707, 0.0078125
          %v1748 = vmul.f32 %v1709, 0.0078125
          %v1749 = vmul.f32 %v1711, 0.0078125
          %v1750 = vmul.f32 %v1713, 0.0078125
          %v1751 = vmul.f32 %v1715, 0.0078125
          %v1752 = vmul.f32 %v1717, 0.0078125
          %v1753 = vmul.f32 %v1719, 0.0078125
          %v1754 = vmul.f32 %v1721, 0.0078125
          %v1755 = vmul.f32 %v1723, 0.0078125
          %v1756 = vmul.f32 %v1724, %v1724
          %v1757 = vmul.f32 %v1725, %v1725
          %v1758 = vmul.f32 %v1726, %v1726
          %v1759 = vmul.f32 %v1727, %v1727
          %v1760 = vmul.f32 %v1728, %v1728
          %v1761 = vmul.f32 %v1729, %v1729
          %v1762 = vmul.f32 %v1730, %v1730
          %v1763 = vmul.f32 %v1731, %v1731
          %v1764 = vmul.f32 %v1732, %v1732
          %v1765 = vmul.f32 %v1733, %v1733
          %v1766 = vmul.f32 %v1734, %v1734
          %v1767 = vmul.f32 %v1735, %v1735
          %v1768 = vmul.f32 %v1736, %v1736
          %v1769 = vmul.f32 %v1737, %v1737
          %v1770 = vmul.f32 %v1738, %v1738
          %v1771 = vmul.f32 %v1739, %v1739
          %v1772 = vsub.f32 %v1740, %v1756
          %v1773 = vsub.f32 %v1741, %v1757
          %v1774 = vsub.f32 %v1742, %v1758
          %v1775 = vsub.f32 %v1743, %v1759
          %v1776 = vsub.f32 %v1744, %v1760
          %v1777 = vsub.f32 %v1745, %v1761
          %v1778 = vsub.f32 %v1746, %v1762
          %v1779 = vsub.f32 %v1747, %v1763
          %v1780 = vsub.f32 %v1748, %v1764
          %v1781 = vsub.f32 %v1749, %v1765
          %v1782 = vsub.f32 %v1750, %v1766
          %v1783 = vsub.f32 %v1751, %v1767
          %v1784 = vsub.f32 %v1752, %v1768
          %v1785 = vsub.f32 %v1753, %v1769
          %v1786 = vsub.f32 %v1754, %v1770
          %v1787 = vsub.f32 %v1755, %v1771
          %v1788 = vmax.f32 %v1772, 0.0
          %v1789 = vmax.f32 %v1773, 0.0
          %v1790 = vmax.f32 %v1774, 0.0
          %v1791 = vmax.f32 %v1775, 0.0
          %v1792 = vmax.f32 %v1776, 0.0
          %v1793 = vmax.f32 %v1777, 0.0
          %v1794 = vmax.f32 %v1778, 0.0
          %v1795 = vmax.f32 %v1779, 0.0
          %v1796 = vmax.f32 %v1780, 0.0
          %v1797 = vmax.f32 %v1781, 0.0
          %v1798 = vmax.f32 %v1782, 0.0
          %v1799 = vmax.f32 %v1783, 0.0
          %v1800 = vmax.f32 %v1784, 0.0
          %v1801 = vmax.f32 %v1785, 0.0
          %v1802 = vmax.f32 %v1786, 0.0
          %v1803 = vmax.f32 %v1787, 0.0
          %v1804 = vadd.f32 %v1788, 1e-05
          %v1805 = vadd.f32 %v1789, 1e-05
          %v1806 = vadd.f32 %v1790, 1e-05
          %v1807 = vadd.f32 %v1791, 1e-05
          %v1808 = vadd.f32 %v1792, 1e-05
          %v1809 = vadd.f32 %v1793, 1e-05
          %v1810 = vadd.f32 %v1794, 1e-05
          %v1811 = vadd.f32 %v1795, 1e-05
          %v1812 = vadd.f32 %v1796, 1e-05
          %v1813 = vadd.f32 %v1797, 1e-05
          %v1814 = vadd.f32 %v1798, 1e-05
          %v1815 = vadd.f32 %v1799, 1e-05
          %v1816 = vadd.f32 %v1800, 1e-05
          %v1817 = vadd.f32 %v1801, 1e-05
          %v1818 = vadd.f32 %v1802, 1e-05
          %v1819 = vadd.f32 %v1803, 1e-05
          %v1820 = vrsqrt.pop %v1804
          %v1821 = vrsqrt.pop %v1805
          %v1822 = vrsqrt.pop %v1806
          %v1823 = vrsqrt.pop %v1807
          %v1824 = vrsqrt.pop %v1808
          %v1825 = vrsqrt.pop %v1809
          %v1826 = vrsqrt.pop %v1810
          %v1827 = vrsqrt.pop %v1811
          %v1828 = vrsqrt.pop %v1812
          %v1829 = vrsqrt.pop %v1813
          %v1830 = vrsqrt.pop %v1814
          %v1831 = vrsqrt.pop %v1815
          %v1832 = vrsqrt.pop %v1816
          %v1833 = vrsqrt.pop %v1817
          %v1834 = vrsqrt.pop %v1818
          %v1835 = vrsqrt.pop %v1819
          %v1836 = vsub.f32 %v1628, %v1724
          %v1837 = vsub.f32 %v1629, %v1725
          %v1838 = vsub.f32 %v1630, %v1726
          %v1839 = vsub.f32 %v1631, %v1727
          %v1840 = vsub.f32 %v1632, %v1728
          %v1841 = vsub.f32 %v1633, %v1729
          %v1842 = vsub.f32 %v1634, %v1730
          %v1843 = vsub.f32 %v1635, %v1731
          %v1844 = vsub.f32 %v1636, %v1732
          %v1845 = vsub.f32 %v1637, %v1733
          %v1846 = vsub.f32 %v1638, %v1734
          %v1847 = vsub.f32 %v1639, %v1735
          %v1848 = vsub.f32 %v1640, %v1736
          %v1849 = vsub.f32 %v1641, %v1737
          %v1850 = vsub.f32 %v1642, %v1738
          %v1851 = vsub.f32 %v1643, %v1739
          %v1852 = vmul.f32 %v1836, %v1820
          %v1853 = vmul.f32 %v1837, %v1821
          %v1854 = vmul.f32 %v1838, %v1822
          %v1855 = vmul.f32 %v1839, %v1823
          %v1856 = vmul.f32 %v1840, %v1824
          %v1857 = vmul.f32 %v1841, %v1825
          %v1858 = vmul.f32 %v1842, %v1826
          %v1859 = vmul.f32 %v1843, %v1827
          %v1860 = vmul.f32 %v1844, %v1828
          %v1861 = vmul.f32 %v1845, %v1829
          %v1862 = vmul.f32 %v1846, %v1830
          %v1863 = vmul.f32 %v1847, %v1831
          %v1864 = vmul.f32 %v1848, %v1832
          %v1865 = vmul.f32 %v1849, %v1833
          %v1866 = vmul.f32 %v1850, %v1834
          %v1867 = vmul.f32 %v1851, %v1835
          %v1868 = vld [vmem:[%s5] sm:$0x1]
          %v1870 = vlaneseq
          %v1871 = vshrl.u32 %v1870, 7
          %v1872 = vsub.s32 0, %v1871
          %v1873 = vrot.slane %v1868, %v1872
          %v1875 = vmul.f32 %v1852, %v1873
          %v1876 = vmul.f32 %v1853, %v1873
          %v1877 = vmul.f32 %v1854, %v1873
          %v1878 = vmul.f32 %v1855, %v1873
          %v1879 = vmul.f32 %v1856, %v1873
          %v1880 = vmul.f32 %v1857, %v1873
          %v1881 = vmul.f32 %v1858, %v1873
          %v1882 = vmul.f32 %v1859, %v1873
          %v1883 = vmul.f32 %v1860, %v1873
          %v1884 = vmul.f32 %v1861, %v1873
          %v1885 = vmul.f32 %v1862, %v1873
          %v1886 = vmul.f32 %v1863, %v1873
          %v1887 = vmul.f32 %v1864, %v1873
          %v1888 = vmul.f32 %v1865, %v1873
          %v1889 = vmul.f32 %v1866, %v1873
          %v1890 = vmul.f32 %v1867, %v1873
          %v1891 = vld [vmem:[%s6] sm:$0x1]
          %v1893 = vlaneseq
          %v1894 = vshrl.u32 %v1893, 7
          %v1895 = vsub.s32 0, %v1894
          %v1896 = vrot.slane %v1891, %v1895
          %v1898 = vadd.f32 %v1875, %v1896
          %v1899 = vadd.f32 %v1876, %v1896
          %v1900 = vadd.f32 %v1877, %v1896
          %v1901 = vadd.f32 %v1878, %v1896
          %v1902 = vadd.f32 %v1879, %v1896
          %v1903 = vadd.f32 %v1880, %v1896
          %v1904 = vadd.f32 %v1881, %v1896
          %v1905 = vadd.f32 %v1882, %v1896
          %v1906 = vadd.f32 %v1883, %v1896
          %v1907 = vadd.f32 %v1884, %v1896
          %v1908 = vadd.f32 %v1885, %v1896
          %v1909 = vadd.f32 %v1886, %v1896
          %v1910 = vadd.f32 %v1887, %v1896
          %v1911 = vadd.f32 %v1888, %v1896
          %v1912 = vadd.f32 %v1889, %v1896
          %v1913 = vadd.f32 %v1890, %v1896
          %1914 = vst [vmem:[%s330] sm:$0xff] %v1898
          %1915 = vst [vmem:[%s330 + $0x8] sm:$0xff] %v1899
          %1916 = vst [vmem:[%s330 + $0x10] sm:$0xff] %v1900
          %1917 = vst [vmem:[%s330 + $0x18] sm:$0xff] %v1901
          %1918 = vst [vmem:[%s330 + $0x20] sm:$0xff] %v1902
          %1919 = vst [vmem:[%s330 + $0x28] sm:$0xff] %v1903
          %1920 = vst [vmem:[%s330 + $0x30] sm:$0xff] %v1904
          %1921 = vst [vmem:[%s330 + $0x38] sm:$0xff] %v1905
          %1922 = vst [vmem:[%s330 + $0x40] sm:$0xff] %v1906
          %1923 = vst [vmem:[%s330 + $0x48] sm:$0xff] %v1907
          %1924 = vst [vmem:[%s330 + $0x50] sm:$0xff] %v1908
          %1925 = vst [vmem:[%s330 + $0x58] sm:$0xff] %v1909
          %1926 = vst [vmem:[%s330 + $0x60] sm:$0xff] %v1910
          %1927 = vst [vmem:[%s330 + $0x68] sm:$0xff] %v1911
          %1928 = vst [vmem:[%s330 + $0x70] sm:$0xff] %v1912
          %1929 = vst [vmem:[%s330 + $0x78] sm:$0xff] %v1913
        $region56: #{_ffn_pallas.1} parent=47 // pred_fallthru
          _
        %s1930 = sand.u32 %s208, 1
        %s1931 = scalar_lea.sflag [#allocation5], %s1930
        %s1932 = sand.u32 %s208, 1
        %s1933 = smul.addr %s1932, 128
        %s1934 = scalar_lea.vmem [#allocation4], %s1933
        // Predicated region
        $region57: #{_ffn_pallas.1} parent=47 // pred_check
          %p1935 = pneg %p218
        $region58: #{_ffn_pallas.1} parent=47 // pred_check_branch
          %1937 = sbr.rel (%p1935) target = $region60
        $region59: #{_ffn_pallas.1} parent=47 // pred_region
          %s1938 = smul.u32 16, %s25
          %s1940 = ssub.s32 2048, 2048
          %1941 = vsyncadd %s1931, %s1940
          %s1942 = smul.addr %s1938, 128
          %s1943 = scalar_lea.hbm %s7, %s1942
          %s1944 = sshll.u32 %s1934, 4
          %s1945 = int_to_ptr.vmem [resolvable:$true] %s1944
          %1950 = dma.vmem_to_hbm [thread:$0]  %s1945, 2048, %s1943, %s1931, 128, 128, 8
        $region60: #{_ffn_pallas.1} parent=47 // pred_fallthru
          _
      $region48: #{_ffn_pallas.1} parent=5 // pred_fallthru
        _
      %p1951 = scmp.le.s32.totalorder 2, %s16
      // Predicated region
      $region61: #{_ffn_pallas.1} parent=5 // pred_check
        %p1952 = pneg %p1951
      $region62: #{_ffn_pallas.1} parent=5 // pred_check_branch
        %1954 = sbr.rel (%p1952) target = $region64
      $region63: #{_ffn_pallas.1} parent=5 // pred_region
        %s1955 = ssub.s32 %s16, 2
        // Predicated region
        $region65: #{_ffn_pallas.1} parent=63 // pred_check
          %p1956 = pneg %p224
        $region66: #{_ffn_pallas.1} parent=63 // pred_check_branch
          %1958 = sbr.rel (%p1956) target = $region68
        $region67: #{_ffn_pallas.1} parent=63 // pred_region
          %s1959 = sand.u32 %s209, 1
          %s1960 = scalar_lea.sflag [#allocation5], %s1959
          %s1961 = sand.u32 %s209, 1
          %s1962 = smul.addr %s1961, 128
          %s1963 = scalar_lea.vmem [#allocation4], %s1962
          %1964 = dma.done %s1960, 2048
        $region68: #{_ffn_pallas.1} parent=63 // pred_fallthru
          _
      $region64: #{_ffn_pallas.1} parent=5 // pred_fallthru
        _
    $region6: #{_ffn_pallas.1} parent=1 // loop_footer
      %s20 = sadd.s32 1, %s16
    $region7: #{_ffn_pallas.1} parent=1 // loop_footer_branch
      %15 = sbr.rel target = $region3
    $region8: #{_ffn_pallas.1} parent=1 // loop_exit
      _
    %1965 = vsyncpa [#allocation5], 1
    %s1966 = scalar_lea.sflag [#allocation5], 1
    %1967 = vsyncpa %s1966, 1

</llo_original>
